<compile_context>
chip_gen: v7x
topology: tpu7x:2x2x1
jax: 0.10.0
libtpu: 0.0.40
codegen_flags: <defaults>
</compile_context>

<pallas_src>
import functools

import jax
import jax.numpy as jnp
from jax.experimental import pallas as pl
from jax.experimental.pallas import tpu as pltpu


def mha_kernel(x_ref, wq_ref, wkv_ref, wo_ref, bo_ref, o_ref,
               m_ref, l_ref, acc_ref, *,
               num_heads: int, head_dim: int, tq: int, tk: int):
    """One (batch, query-tile) grid step.

    x_ref:   (1, T, C)   full sequence for this batch element (constant over q axis)
    wq_ref:  (C, C)      Q weight, pre-transposed, compute dtype
    wkv_ref: (C, 2C)     [K | V] weights, pre-transposed & fused, compute dtype
    wo_ref:  (C, C)      out-proj weight, pre-transposed, compute dtype
    bo_ref:  (1, C)      out-proj bias (f32)
    o_ref:   (1, TQ, C)  output tile
    m_ref:   (H, TQ, 1)  running row max      (VMEM scratch, f32)
    l_ref:   (H, TQ, 1)  running softmax denom (VMEM scratch, f32)
    acc_ref: (TQ, C)     per-head output slab == "concat"  (VMEM scratch, f32)
    """
    H, D = num_heads, head_dim
    C = H * D
    cdt = wq_ref.dtype                       # MXU input (compute) dtype
    qi = pl.program_id(1)

    # ---- init online-softmax state (scratch persists across grid steps) ----
    m_ref[...] = jnp.full((H, tq, 1), -1e30, dtype=jnp.float32)
    l_ref[...] = jnp.zeros((H, tq, 1), dtype=jnp.float32)
    acc_ref[...] = jnp.zeros((tq, C), dtype=jnp.float32)

    # ---- Q projection for this query tile: one wide (TQ,C)@(C,C) matmul ----
    q_start = pl.multiple_of(qi * tq, tq)
    xq = x_ref[0, pl.ds(q_start, tq), :].astype(cdt)                    # (TQ, C)
    scale = 1.0 / (float(D) ** 0.5)
    q_all = (jnp.dot(xq, wq_ref[...], preferred_element_type=jnp.float32)
             * scale).astype(cdt)                                       # (TQ, C)

    # Causal mask for the diagonal tile only (tq == tk, tile-aligned => local).
    row = jax.lax.broadcasted_iota(jnp.int32, (tq, tk), 0)
    col = jax.lax.broadcasted_iota(jnp.int32, (tq, tk), 1)
    keep_diag = col <= row

    qk_dims = (((1,), (1,)), ((), ()))       # contract last dims, no transpose

    def process_kv_tile(j, *, masked):
        k_start = pl.multiple_of(j * tk, tk)
        xk = x_ref[0, pl.ds(k_start, tk), :].astype(cdt)                # (TK, C)
        # Fused [K | V] projection: one wide (TK,C)@(C,2C) matmul for all heads.
        kv = jnp.dot(xk, wkv_ref[...], preferred_element_type=jnp.float32)  # (TK, 2C)
        for h in range(H):   # static unroll; fine for small H (use a head grid
            #                  axis instead for H >= 16 to bound code size/vregs)
            kh = kv[:, h * D:(h + 1) * D].astype(cdt)                   # (TK, D)
            vh = kv[:, C + h * D:C + (h + 1) * D].astype(cdt)           # (TK, D)
            qh = q_all[:, h * D:(h + 1) * D]                            # (TQ, D)
            s = jax.lax.dot_general(qh, kh, qk_dims,
                                    preferred_element_type=jnp.float32)  # (TQ, TK)
            if masked:
                s = jnp.where(keep_diag, s, jnp.float32(-1e30))
            m_old = m_ref[h]                                            # (TQ, 1)
            m_new = jnp.maximum(m_old, jnp.max(s, axis=-1, keepdims=True))
            alpha = jnp.exp(m_old - m_new)
            p = jnp.exp(s - m_new)                                      # (TQ, TK)
            l_ref[h] = alpha * l_ref[h] + jnp.sum(p, axis=-1, keepdims=True)
            acc_ref[:, h * D:(h + 1) * D] = (
                alpha * acc_ref[:, h * D:(h + 1) * D]
                + jnp.dot(p.astype(cdt), vh, preferred_element_type=jnp.float32))
            m_ref[h] = m_new

    # KV tiles strictly below the diagonal are fully visible (no mask); tiles
    # strictly above the diagonal are never visited (causal skip, ~2x less MXU).
    def _unmasked_body(j, carry):
        process_kv_tile(j, masked=False)
        return carry
    jax.lax.fori_loop(0, qi, _unmasked_body, 0)
    process_kv_tile(qi, masked=True)

    # ---- normalize per head (EUP approx reciprocal), then one wide out-proj ----
    for h in range(H):
        inv_l = pl.reciprocal(l_ref[h], approx=True)                    # (TQ, 1)
        acc_ref[:, h * D:(h + 1) * D] = acc_ref[:, h * D:(h + 1) * D] * inv_l

    concat = acc_ref[...].astype(cdt)                                   # (TQ, C)
    out = (jnp.dot(concat, wo_ref[...], preferred_element_type=jnp.float32)
           + bo_ref[...].astype(jnp.float32))
    o_ref[0] = out.astype(o_ref.dtype)


def _pick_q_tile(T: int) -> int:
    # Largest query tile <= 256 that divides T and respects the (8, 128)
    # sublane rule (multiple of 8), otherwise fall back to the full T.
    for cand in (256, 128, 64, 32, 16, 8):
        if T % cand == 0:
            return cand
    return T


def multi_head_attention(x, wq, wk, wv, wo, bo, *, num_heads: int,
                         compute_dtype=jnp.bfloat16, q_block=None):
    """x: (B, T, C); wq/wk/wv/wo: (C, C) PyTorch layout (out, in); bo: (C,)."""
    B, T, C = x.shape
    assert C % num_heads == 0
    head_dim = C // num_heads

    tq = q_block if q_block is not None else _pick_q_tile(T)
    assert T % tq == 0 and (tq == T or tq % 8 == 0), "bad query tile"
    num_q = T // tq

    # Pre-transpose so the kernel does x @ W (== x @ W.T for PyTorch Linear),
    # fuse K|V into one weight, and cast MXU inputs to the compute dtype.
    wq_t = wq.T.astype(compute_dtype)                                    # (C, C)
    wkv_t = jnp.concatenate([wk.T, wv.T], axis=1).astype(compute_dtype)  # (C, 2C)
    wo_t = wo.T.astype(compute_dtype)                                    # (C, C)
    bo2d = bo.reshape(1, C).astype(jnp.float32)

    kernel = functools.partial(mha_kernel, num_heads=num_heads,
                               head_dim=head_dim, tq=tq, tk=tq)

    grid_spec = pltpu.PrefetchScalarGridSpec(
        num_scalar_prefetch=0,
        grid=(B, num_q),
        in_specs=[
            pl.BlockSpec((1, T, C), lambda b, q: (b, 0, 0)),   # x (full seq / batch)
            pl.BlockSpec((C, C), lambda b, q: (0, 0)),          # Wq^T
            pl.BlockSpec((C, 2 * C), lambda b, q: (0, 0)),      # [Wk^T | Wv^T]
            pl.BlockSpec((C, C), lambda b, q: (0, 0)),          # Wo^T
            pl.BlockSpec((1, C), lambda b, q: (0, 0)),          # bias_o
        ],
        out_specs=pl.BlockSpec((1, tq, C), lambda b, q: (b, q, 0)),
        scratch_shapes=[
            pltpu.VMEM((num_heads, tq, 1), jnp.float32),   # running max
            pltpu.VMEM((num_heads, tq, 1), jnp.float32),   # running denom
            pltpu.VMEM((tq, C), jnp.float32),              # head-output slab
        ],
    )

    return pl.pallas_call(
        kernel,
        out_shape=jax.ShapeDtypeStruct((B, T, C), x.dtype),
        grid_spec=grid_spec,
        compiler_params=pltpu.CompilerParams(
            dimension_semantics=("parallel", "parallel"),
            vmem_limit_bytes=32 * 1024 * 1024,
        ),
    )(x, wq_t, wkv_t, wo_t, bo2d)


def reference_mha(x, wq, wk, wv, wo, bo, *, num_heads: int):
    """Pure-JAX reference mirroring the PyTorch forward exactly (f32)."""
    B, T, C = x.shape
    H = num_heads
    D = C // H
    Q = (x @ wq.T).reshape(B, T, H, D).transpose(0, 2, 1, 3)
    K = (x @ wk.T).reshape(B, T, H, D).transpose(0, 2, 1, 3)
    V = (x @ wv.T).reshape(B, T, H, D).transpose(0, 2, 1, 3)
    scores = jnp.einsum('bhqd,bhkd->bhqk', Q, K) / (D ** 0.5)
    tril = jnp.tril(jnp.ones((T, T)))
    scores = jnp.where(tril == 0, float('-inf'), scores)
    w = jax.nn.softmax(scores, axis=-1)
    out = jnp.einsum('bhqk,bhkd->bhqd', w, V)
    out = out.transpose(0, 2, 1, 3).reshape(B, T, C)
    return out @ wo.T + bo


if __name__ == "__main__":
    key = jax.random.PRNGKey(0)
    kx, kq, kk, kv, ko, kb, kx2 = jax.random.split(key, 7)

    # Config 1: small shapes consistent with the module (B=2, T=8, C=32, H=4).
    B, T, C, H = 2, 8, 32, 4
    scale = 1.0 / (C ** 0.5)
    x = jax.random.normal(kx, (B, T, C), dtype=jnp.float32)
    # PyTorch nn.Linear weight layout: (out_features, in_features)
    wq = jax.random.uniform(kq, (C, C), jnp.float32, -scale, scale)
    wk = jax.random.uniform(kk, (C, C), jnp.float32, -scale, scale)
    wv = jax.random.uniform(kv, (C, C), jnp.float32, -scale, scale)
    wo = jax.random.uniform(ko, (C, C), jnp.float32, -scale, scale)
    bo = jax.random.uniform(kb, (C,), jnp.float32, -scale, scale)

    ref = reference_mha(x, wq, wk, wv, wo, bo, num_heads=H)

    # Default bf16 MXU-input path (loose, bf16-level tolerance).
    out_bf16 = jax.block_until_ready(
        multi_head_attention(x, wq, wk, wv, wo, bo, num_heads=H))
    assert out_bf16.shape == (B, T, C)
    assert jnp.allclose(out_bf16, ref, atol=1e-1, rtol=1e-1), "bf16 kernel mismatch"

    # f32 MXU-input path (tight; only error source is the approx reciprocal).
    out_f32 = jax.block_until_ready(
        multi_head_attention(x, wq, wk, wv, wo, bo, num_heads=H,
                             compute_dtype=jnp.float32))
    assert jnp.allclose(out_f32, ref, atol=1e-2, rtol=1e-2), "f32 kernel mismatch"

    # Config 2: longer sequence with a forced 8-row query tile to exercise the
    # multi-tile online-softmax path (causal tile skip + diagonal masked tile).
    T2 = 16
    x2 = jax.random.normal(kx2, (B, T2, C), dtype=jnp.float32)
    ref2 = reference_mha(x2, wq, wk, wv, wo, bo, num_heads=H)
    out2 = jax.block_until_ready(
        multi_head_attention(x2, wq, wk, wv, wo, bo, num_heads=H,
                             compute_dtype=jnp.float32, q_block=8))
    assert jnp.allclose(out2, ref2, atol=1e-2, rtol=1e-2), "tiled kernel mismatch"

    print("KERNEL_OK")
</pallas_src>

<mosaic_0001>
module attributes {stable_mosaic.version = 11 : i64} {
  func.func @mha_kernel(%arg0: i32, %arg1: i32, %arg2: memref<1x8x32xf32, #tpu.memory_space<vmem>>, %arg3: memref<32x32xbf16, #tpu.memory_space<vmem>>, %arg4: memref<32x64xbf16, #tpu.memory_space<vmem>>, %arg5: memref<32x32xbf16, #tpu.memory_space<vmem>>, %arg6: memref<1x32xf32, #tpu.memory_space<vmem>>, %arg7: memref<1x8x32xf32, #tpu.memory_space<vmem>>, %arg8: memref<4x8x1xf32, #tpu.memory_space<vmem>>, %arg9: memref<4x8x1xf32, #tpu.memory_space<vmem>>, %arg10: memref<8x32xf32, #tpu.memory_space<vmem>>) attributes {dimension_semantics = [#tpu.dimension_semantics<parallel>, #tpu.dimension_semantics<parallel>], iteration_bounds = array<i64: 2, 1>, scalar_prefetch = 0 : i64, scratch_operands = 3 : i64, tpu.core_type = #tpu.core_type<tc>, window_params = [{transform_indices = @transform_0, window_bounds = array<i64: 1, 8, 32>}, {pipeline_mode = #tpu.pipeline_mode<synchronous>, transform_indices = @transform_1, window_bounds = array<i64: 32, 32>}, {pipeline_mode = #tpu.pipeline_mode<synchronous>, transform_indices = @transform_2, window_bounds = array<i64: 32, 64>}, {pipeline_mode = #tpu.pipeline_mode<synchronous>, transform_indices = @transform_3, window_bounds = array<i64: 32, 32>}, {pipeline_mode = #tpu.pipeline_mode<synchronous>, transform_indices = @transform_4, window_bounds = array<i64: 1, 32>}, {transform_indices = @transform_5, window_bounds = array<i64: 1, 8, 32>}]} {
    %cst = arith.constant -1.000000e+30 : f32
    %0 = vector.broadcast %cst : f32 to vector<4x8x1xf32>
    %c0 = arith.constant 0 : index
    %c0_0 = arith.constant 0 : index
    %c0_1 = arith.constant 0 : index
    %1 = vector.load %arg8[%c0, %c0_0, %c0_1] : memref<4x8x1xf32, #tpu.memory_space<vmem>>, vector<4x8x1xf32>
    tpu.vector_store %arg8[%c0, %c0_0, %c0_1], %0 {strides = array<i32>} : memref<4x8x1xf32, #tpu.memory_space<vmem>>, vector<4x8x1xf32>,
    %cst_2 = arith.constant 0.000000e+00 : f32
    %2 = vector.broadcast %cst_2 : f32 to vector<4x8x1xf32>
    %c0_3 = arith.constant 0 : index
    %c0_4 = arith.constant 0 : index
    %c0_5 = arith.constant 0 : index
    %3 = vector.load %arg9[%c0_3, %c0_4, %c0_5] : memref<4x8x1xf32, #tpu.memory_space<vmem>>, vector<4x8x1xf32>
    tpu.vector_store %arg9[%c0_3, %c0_4, %c0_5], %2 {strides = array<i32>} : memref<4x8x1xf32, #tpu.memory_space<vmem>>, vector<4x8x1xf32>,
    %cst_6 = arith.constant 0.000000e+00 : f32
    %4 = vector.broadcast %cst_6 : f32 to vector<8x32xf32>
    %c0_7 = arith.constant 0 : index
    %c0_8 = arith.constant 0 : index
    %5 = vector.load %arg10[%c0_7, %c0_8] : memref<8x32xf32, #tpu.memory_space<vmem>>, vector<8x32xf32>
    tpu.vector_store %arg10[%c0_7, %c0_8], %4 {strides = array<i32>} : memref<8x32xf32, #tpu.memory_space<vmem>>, vector<8x32xf32>,
    %c8_i32 = arith.constant 8 : i32
    %6 = arith.muli %arg1, %c8_i32 : i32
    %7 = tpu.assume_multiple %6, 8 : i32
    %c0_9 = arith.constant 0 : index
    %8 = arith.index_cast %7 : i32 to index
    %c0_10 = arith.constant 0 : index
    %9 = vector.load %arg2[%c0_9, %8, %c0_10] : memref<1x8x32xf32, #tpu.memory_space<vmem>>, vector<1x8x32xf32>
    %10 = vector.shape_cast %9 : vector<1x8x32xf32> to vector<8x32xf32>
    %11 = arith.truncf %10 : vector<8x32xf32> to vector<8x32xbf16>
    %c0_11 = arith.constant 0 : index
    %c0_12 = arith.constant 0 : index
    %12 = vector.load %arg3[%c0_11, %c0_12] : memref<32x32xbf16, #tpu.memory_space<vmem>>, vector<32x32xbf16>
    %cst_13 = arith.constant dense<0.000000e+00> : vector<8x32xf32>
    %13 = tpu.matmul %11, %12, %cst_13 {dimension_numbers = #tpu.dot_dimension_numbers<[1], [0], [0], [1], [0, 0, 1, 1], [], []>} : vector<8x32xbf16>, vector<32x32xbf16>, vector<8x32xf32> -> vector<8x32xf32>
    %cst_14 = arith.constant 0.353553385 : f32
    %14 = vector.broadcast %cst_14 : f32 to vector<8x32xf32>
    %15 = arith.mulf %13, %14 : vector<8x32xf32>
    %16 = arith.truncf %15 : vector<8x32xf32> to vector<8x32xbf16>
    %17 = tpu.iota {dimensions = array<i32: 0>} : vector<8x8xi32>
    %18 = tpu.iota {dimensions = array<i32: 1>} : vector<8x8xi32>
    %19 = arith.cmpi sle, %18, %17 : vector<8x8xi32>
    %c0_i32 = arith.constant 0 : i32
    %c0_i32_15 = arith.constant 0 : i32
    %20 = arith.subi %arg1, %c0_i32_15 : i32
    %21 = arith.addi %c0_i32_15, %20 : i32
    %c1_i32 = arith.constant 1 : i32
    scf.for %arg11 = %c0_i32_15 to %21 step %c1_i32  : i32 {
      %c8_i32_138 = arith.constant 8 : i32
      %216 = arith.muli %arg11, %c8_i32_138 : i32
      %217 = tpu.assume_multiple %216, 8 : i32
      %c0_139 = arith.constant 0 : index
      %218 = arith.index_cast %217 : i32 to index
      %c0_140 = arith.constant 0 : index
      %219 = vector.load %arg2[%c0_139, %218, %c0_140] : memref<1x8x32xf32, #tpu.memory_space<vmem>>, vector<1x8x32xf32>
      %220 = vector.shape_cast %219 : vector<1x8x32xf32> to vector<8x32xf32>
      %221 = arith.truncf %220 : vector<8x32xf32> to vector<8x32xbf16>
      %c0_141 = arith.constant 0 : index
      %c0_142 = arith.constant 0 : index
      %222 = vector.load %arg4[%c0_141, %c0_142] : memref<32x64xbf16, #tpu.memory_space<vmem>>, vector<32x64xbf16>
      %cst_143 = arith.constant dense<0.000000e+00> : vector<8x64xf32>
      %223 = tpu.matmul %221, %222, %cst_143 {dimension_numbers = #tpu.dot_dimension_numbers<[1], [0], [0], [1], [0, 0, 1, 1], [], []>} : vector<8x32xbf16>, vector<32x64xbf16>, vector<8x64xf32> -> vector<8x64xf32>
      %224 = vector.extract_strided_slice %223 {offsets = [0, 0], sizes = [8, 8], strides = [1, 1]} : vector<8x64xf32> to vector<8x8xf32>
      %225 = arith.truncf %224 : vector<8x8xf32> to vector<8x8xbf16>
      %226 = vector.extract_strided_slice %223 {offsets = [0, 32], sizes = [8, 8], strides = [1, 1]} : vector<8x64xf32> to vector<8x8xf32>
      %227 = arith.truncf %226 : vector<8x8xf32> to vector<8x8xbf16>
      %228 = vector.extract_strided_slice %16 {offsets = [0, 0], sizes = [8, 8], strides = [1, 1]} : vector<8x32xbf16> to vector<8x8xbf16>
      %cst_144 = arith.constant dense<0.000000e+00> : vector<8x8xf32>
      %229 = tpu.matmul %228, %225, %cst_144 {dimension_numbers = #tpu.dot_dimension_numbers<[1], [1], [0], [0], [0, 0, 1, 0], [], []>} : vector<8x8xbf16>, vector<8x8xbf16>, vector<8x8xf32> -> vector<8x8xf32>
      %c0_145 = arith.constant 0 : index
      %c0_146 = arith.constant 0 : index
      %c0_147 = arith.constant 0 : index
      %230 = vector.load %arg8[%c0_145, %c0_146, %c0_147] : memref<4x8x1xf32, #tpu.memory_space<vmem>>, vector<1x8x1xf32>
      %231 = vector.shape_cast %230 : vector<1x8x1xf32> to vector<8x1xf32>
      %cst_148 = arith.constant dense<0xFF800000> : vector<8xf32>
      %232 = vector.multi_reduction <maximumf>, %229, %cst_148 [1] : vector<8x8xf32> to vector<8xf32>
      %233 = vector.shape_cast %232 : vector<8xf32> to vector<8x1xf32>
      %234 = arith.maximumf %231, %233 : vector<8x1xf32>
      %235 = arith.subf %231, %234 : vector<8x1xf32>
      %236 = math.exp %235 : vector<8x1xf32>
      %237 = vector.broadcast %234 : vector<8x1xf32> to vector<8x8xf32>
      %238 = arith.subf %229, %237 : vector<8x8xf32>
      %239 = math.exp %238 : vector<8x8xf32>
      %c0_149 = arith.constant 0 : index
      %c0_150 = arith.constant 0 : index
      %c0_151 = arith.constant 0 : index
      %240 = vector.load %arg9[%c0_149, %c0_150, %c0_151] : memref<4x8x1xf32, #tpu.memory_space<vmem>>, vector<1x8x1xf32>
      %241 = vector.shape_cast %240 : vector<1x8x1xf32> to vector<8x1xf32>
      %242 = arith.mulf %236, %241 : vector<8x1xf32>
      %cst_152 = arith.constant dense<0.000000e+00> : vector<8xf32>
      %243 = vector.multi_reduction <add>, %239, %cst_152 [1] : vector<8x8xf32> to vector<8xf32>
      %244 = vector.shape_cast %243 : vector<8xf32> to vector<8x1xf32>
      %245 = arith.addf %242, %244 : vector<8x1xf32>
      %c0_153 = arith.constant 0 : index
      %c0_154 = arith.constant 0 : index
      %c0_155 = arith.constant 0 : index
      %246 = vector.load %arg9[%c0_153, %c0_154, %c0_155] : memref<4x8x1xf32, #tpu.memory_space<vmem>>, vector<1x8x1xf32>
      %247 = vector.shape_cast %246 : vector<1x8x1xf32> to vector<8x1xf32>
      %248 = vector.shape_cast %245 : vector<8x1xf32> to vector<1x8x1xf32>
      tpu.vector_store %arg9[%c0_153, %c0_154, %c0_155], %248 {strides = array<i32>} : memref<4x8x1xf32, #tpu.memory_space<vmem>>, vector<1x8x1xf32>,
      %c0_156 = arith.constant 0 : index
      %c0_157 = arith.constant 0 : index
      %249 = vector.load %arg10[%c0_156, %c0_157] : memref<8x32xf32, #tpu.memory_space<vmem>>, vector<8x8xf32>
      %250 = vector.broadcast %236 : vector<8x1xf32> to vector<8x8xf32>
      %251 = arith.mulf %250, %249 : vector<8x8xf32>
      %252 = arith.truncf %239 : vector<8x8xf32> to vector<8x8xbf16>
      %cst_158 = arith.constant dense<0.000000e+00> : vector<8x8xf32>
      %253 = tpu.matmul %252, %227, %cst_158 {dimension_numbers = #tpu.dot_dimension_numbers<[1], [0], [0], [1], [0, 0, 1, 1], [], []>} : vector<8x8xbf16>, vector<8x8xbf16>, vector<8x8xf32> -> vector<8x8xf32>
      %254 = arith.addf %251, %253 : vector<8x8xf32>
      %c0_159 = arith.constant 0 : index
      %c0_160 = arith.constant 0 : index
      %255 = vector.load %arg10[%c0_159, %c0_160] : memref<8x32xf32, #tpu.memory_space<vmem>>, vector<8x8xf32>
      tpu.vector_store %arg10[%c0_159, %c0_160], %254 {strides = array<i32>} : memref<8x32xf32, #tpu.memory_space<vmem>>, vector<8x8xf32>,
      %c0_161 = arith.constant 0 : index
      %c0_162 = arith.constant 0 : index
      %c0_163 = arith.constant 0 : index
      %256 = vector.load %arg8[%c0_161, %c0_162, %c0_163] : memref<4x8x1xf32, #tpu.memory_space<vmem>>, vector<1x8x1xf32>
      %257 = vector.shape_cast %256 : vector<1x8x1xf32> to vector<8x1xf32>
      %258 = vector.shape_cast %234 : vector<8x1xf32> to vector<1x8x1xf32>
      tpu.vector_store %arg8[%c0_161, %c0_162, %c0_163], %258 {strides = array<i32>} : memref<4x8x1xf32, #tpu.memory_space<vmem>>, vector<1x8x1xf32>,
      %259 = vector.extract_strided_slice %223 {offsets = [0, 8], sizes = [8, 8], strides = [1, 1]} : vector<8x64xf32> to vector<8x8xf32>
      %260 = arith.truncf %259 : vector<8x8xf32> to vector<8x8xbf16>
      %261 = vector.extract_strided_slice %223 {offsets = [0, 40], sizes = [8, 8], strides = [1, 1]} : vector<8x64xf32> to vector<8x8xf32>
      %262 = arith.truncf %261 : vector<8x8xf32> to vector<8x8xbf16>
      %263 = vector.extract_strided_slice %16 {offsets = [0, 8], sizes = [8, 8], strides = [1, 1]} : vector<8x32xbf16> to vector<8x8xbf16>
      %cst_164 = arith.constant dense<0.000000e+00> : vector<8x8xf32>
      %264 = tpu.matmul %263, %260, %cst_164 {dimension_numbers = #tpu.dot_dimension_numbers<[1], [1], [0], [0], [0, 0, 1, 0], [], []>} : vector<8x8xbf16>, vector<8x8xbf16>, vector<8x8xf32> -> vector<8x8xf32>
      %c1_165 = arith.constant 1 : index
      %c0_166 = arith.constant 0 : index
      %c0_167 = arith.constant 0 : index
      %265 = vector.load %arg8[%c1_165, %c0_166, %c0_167] : memref<4x8x1xf32, #tpu.memory_space<vmem>>, vector<1x8x1xf32>
      %266 = vector.shape_cast %265 : vector<1x8x1xf32> to vector<8x1xf32>
      %cst_168 = arith.constant dense<0xFF800000> : vector<8xf32>
      %267 = vector.multi_reduction <maximumf>, %264, %cst_168 [1] : vector<8x8xf32> to vector<8xf32>
      %268 = vector.shape_cast %267 : vector<8xf32> to vector<8x1xf32>
      %269 = arith.maximumf %266, %268 : vector<8x1xf32>
      %270 = arith.subf %266, %269 : vector<8x1xf32>
      %271 = math.exp %270 : vector<8x1xf32>
      %272 = vector.broadcast %269 : vector<8x1xf32> to vector<8x8xf32>
      %273 = arith.subf %264, %272 : vector<8x8xf32>
      %274 = math.exp %273 : vector<8x8xf32>
      %c1_169 = arith.constant 1 : index
      %c0_170 = arith.constant 0 : index
      %c0_171 = arith.constant 0 : index
      %275 = vector.load %arg9[%c1_169, %c0_170, %c0_171] : memref<4x8x1xf32, #tpu.memory_space<vmem>>, vector<1x8x1xf32>
      %276 = vector.shape_cast %275 : vector<1x8x1xf32> to vector<8x1xf32>
      %277 = arith.mulf %271, %276 : vector<8x1xf32>
      %cst_172 = arith.constant dense<0.000000e+00> : vector<8xf32>
      %278 = vector.multi_reduction <add>, %274, %cst_172 [1] : vector<8x8xf32> to vector<8xf32>
      %279 = vector.shape_cast %278 : vector<8xf32> to vector<8x1xf32>
      %280 = arith.addf %277, %279 : vector<8x1xf32>
      %c1_173 = arith.constant 1 : index
      %c0_174 = arith.constant 0 : index
      %c0_175 = arith.constant 0 : index
      %281 = vector.load %arg9[%c1_173, %c0_174, %c0_175] : memref<4x8x1xf32, #tpu.memory_space<vmem>>, vector<1x8x1xf32>
      %282 = vector.shape_cast %281 : vector<1x8x1xf32> to vector<8x1xf32>
      %283 = vector.shape_cast %280 : vector<8x1xf32> to vector<1x8x1xf32>
      tpu.vector_store %arg9[%c1_173, %c0_174, %c0_175], %283 {strides = array<i32>} : memref<4x8x1xf32, #tpu.memory_space<vmem>>, vector<1x8x1xf32>,
      %c0_176 = arith.constant 0 : index
      %c8_177 = arith.constant 8 : index
      %284 = vector.load %arg10[%c0_176, %c8_177] : memref<8x32xf32, #tpu.memory_space<vmem>>, vector<8x8xf32>
      %285 = vector.broadcast %271 : vector<8x1xf32> to vector<8x8xf32>
      %286 = arith.mulf %285, %284 : vector<8x8xf32>
      %287 = arith.truncf %274 : vector<8x8xf32> to vector<8x8xbf16>
      %cst_178 = arith.constant dense<0.000000e+00> : vector<8x8xf32>
      %288 = tpu.matmul %287, %262, %cst_178 {dimension_numbers = #tpu.dot_dimension_numbers<[1], [0], [0], [1], [0, 0, 1, 1], [], []>} : vector<8x8xbf16>, vector<8x8xbf16>, vector<8x8xf32> -> vector<8x8xf32>
      %289 = arith.addf %286, %288 : vector<8x8xf32>
      %c0_179 = arith.constant 0 : index
      %c8_180 = arith.constant 8 : index
      %290 = vector.load %arg10[%c0_179, %c8_180] : memref<8x32xf32, #tpu.memory_space<vmem>>, vector<8x8xf32>
      tpu.vector_store %arg10[%c0_179, %c8_180], %289 {strides = array<i32>} : memref<8x32xf32, #tpu.memory_space<vmem>>, vector<8x8xf32>,
      %c1_181 = arith.constant 1 : index
      %c0_182 = arith.constant 0 : index
      %c0_183 = arith.constant 0 : index
      %291 = vector.load %arg8[%c1_181, %c0_182, %c0_183] : memref<4x8x1xf32, #tpu.memory_space<vmem>>, vector<1x8x1xf32>
      %292 = vector.shape_cast %291 : vector<1x8x1xf32> to vector<8x1xf32>
      %293 = vector.shape_cast %269 : vector<8x1xf32> to vector<1x8x1xf32>
      tpu.vector_store %arg8[%c1_181, %c0_182, %c0_183], %293 {strides = array<i32>} : memref<4x8x1xf32, #tpu.memory_space<vmem>>, vector<1x8x1xf32>,
      %294 = vector.extract_strided_slice %223 {offsets = [0, 16], sizes = [8, 8], strides = [1, 1]} : vector<8x64xf32> to vector<8x8xf32>
      %295 = arith.truncf %294 : vector<8x8xf32> to vector<8x8xbf16>
      %296 = vector.extract_strided_slice %223 {offsets = [0, 48], sizes = [8, 8], strides = [1, 1]} : vector<8x64xf32> to vector<8x8xf32>
      %297 = arith.truncf %296 : vector<8x8xf32> to vector<8x8xbf16>
      %298 = vector.extract_strided_slice %16 {offsets = [0, 16], sizes = [8, 8], strides = [1, 1]} : vector<8x32xbf16> to vector<8x8xbf16>
      %cst_184 = arith.constant dense<0.000000e+00> : vector<8x8xf32>
      %299 = tpu.matmul %298, %295, %cst_184 {dimension_numbers = #tpu.dot_dimension_numbers<[1], [1], [0], [0], [0, 0, 1, 0], [], []>} : vector<8x8xbf16>, vector<8x8xbf16>, vector<8x8xf32> -> vector<8x8xf32>
      %c2_185 = arith.constant 2 : index
      %c0_186 = arith.constant 0 : index
      %c0_187 = arith.constant 0 : index
      %300 = vector.load %arg8[%c2_185, %c0_186, %c0_187] : memref<4x8x1xf32, #tpu.memory_space<vmem>>, vector<1x8x1xf32>
      %301 = vector.shape_cast %300 : vector<1x8x1xf32> to vector<8x1xf32>
      %cst_188 = arith.constant dense<0xFF800000> : vector<8xf32>
      %302 = vector.multi_reduction <maximumf>, %299, %cst_188 [1] : vector<8x8xf32> to vector<8xf32>
      %303 = vector.shape_cast %302 : vector<8xf32> to vector<8x1xf32>
      %304 = arith.maximumf %301, %303 : vector<8x1xf32>
      %305 = arith.subf %301, %304 : vector<8x1xf32>
      %306 = math.exp %305 : vector<8x1xf32>
      %307 = vector.broadcast %304 : vector<8x1xf32> to vector<8x8xf32>
      %308 = arith.subf %299, %307 : vector<8x8xf32>
      %309 = math.exp %308 : vector<8x8xf32>
      %c2_189 = arith.constant 2 : index
      %c0_190 = arith.constant 0 : index
      %c0_191 = arith.constant 0 : index
      %310 = vector.load %arg9[%c2_189, %c0_190, %c0_191] : memref<4x8x1xf32, #tpu.memory_space<vmem>>, vector<1x8x1xf32>
      %311 = vector.shape_cast %310 : vector<1x8x1xf32> to vector<8x1xf32>
      %312 = arith.mulf %306, %311 : vector<8x1xf32>
      %cst_192 = arith.constant dense<0.000000e+00> : vector<8xf32>
      %313 = vector.multi_reduction <add>, %309, %cst_192 [1] : vector<8x8xf32> to vector<8xf32>
      %314 = vector.shape_cast %313 : vector<8xf32> to vector<8x1xf32>
      %315 = arith.addf %312, %314 : vector<8x1xf32>
      %c2_193 = arith.constant 2 : index
      %c0_194 = arith.constant 0 : index
      %c0_195 = arith.constant 0 : index
      %316 = vector.load %arg9[%c2_193, %c0_194, %c0_195] : memref<4x8x1xf32, #tpu.memory_space<vmem>>, vector<1x8x1xf32>
      %317 = vector.shape_cast %316 : vector<1x8x1xf32> to vector<8x1xf32>
      %318 = vector.shape_cast %315 : vector<8x1xf32> to vector<1x8x1xf32>
      tpu.vector_store %arg9[%c2_193, %c0_194, %c0_195], %318 {strides = array<i32>} : memref<4x8x1xf32, #tpu.memory_space<vmem>>, vector<1x8x1xf32>,
      %c0_196 = arith.constant 0 : index
      %c16_197 = arith.constant 16 : index
      %319 = vector.load %arg10[%c0_196, %c16_197] : memref<8x32xf32, #tpu.memory_space<vmem>>, vector<8x8xf32>
      %320 = vector.broadcast %306 : vector<8x1xf32> to vector<8x8xf32>
      %321 = arith.mulf %320, %319 : vector<8x8xf32>
      %322 = arith.truncf %309 : vector<8x8xf32> to vector<8x8xbf16>
      %cst_198 = arith.constant dense<0.000000e+00> : vector<8x8xf32>
      %323 = tpu.matmul %322, %297, %cst_198 {dimension_numbers = #tpu.dot_dimension_numbers<[1], [0], [0], [1], [0, 0, 1, 1], [], []>} : vector<8x8xbf16>, vector<8x8xbf16>, vector<8x8xf32> -> vector<8x8xf32>
      %324 = arith.addf %321, %323 : vector<8x8xf32>
      %c0_199 = arith.constant 0 : index
      %c16_200 = arith.constant 16 : index
      %325 = vector.load %arg10[%c0_199, %c16_200] : memref<8x32xf32, #tpu.memory_space<vmem>>, vector<8x8xf32>
      tpu.vector_store %arg10[%c0_199, %c16_200], %324 {strides = array<i32>} : memref<8x32xf32, #tpu.memory_space<vmem>>, vector<8x8xf32>,
      %c2_201 = arith.constant 2 : index
      %c0_202 = arith.constant 0 : index
      %c0_203 = arith.constant 0 : index
      %326 = vector.load %arg8[%c2_201, %c0_202, %c0_203] : memref<4x8x1xf32, #tpu.memory_space<vmem>>, vector<1x8x1xf32>
      %327 = vector.shape_cast %326 : vector<1x8x1xf32> to vector<8x1xf32>
      %328 = vector.shape_cast %304 : vector<8x1xf32> to vector<1x8x1xf32>
      tpu.vector_store %arg8[%c2_201, %c0_202, %c0_203], %328 {strides = array<i32>} : memref<4x8x1xf32, #tpu.memory_space<vmem>>, vector<1x8x1xf32>,
      %329 = vector.extract_strided_slice %223 {offsets = [0, 24], sizes = [8, 8], strides = [1, 1]} : vector<8x64xf32> to vector<8x8xf32>
      %330 = arith.truncf %329 : vector<8x8xf32> to vector<8x8xbf16>
      %331 = vector.extract_strided_slice %223 {offsets = [0, 56], sizes = [8, 8], strides = [1, 1]} : vector<8x64xf32> to vector<8x8xf32>
      %332 = arith.truncf %331 : vector<8x8xf32> to vector<8x8xbf16>
      %333 = vector.extract_strided_slice %16 {offsets = [0, 24], sizes = [8, 8], strides = [1, 1]} : vector<8x32xbf16> to vector<8x8xbf16>
      %cst_204 = arith.constant dense<0.000000e+00> : vector<8x8xf32>
      %334 = tpu.matmul %333, %330, %cst_204 {dimension_numbers = #tpu.dot_dimension_numbers<[1], [1], [0], [0], [0, 0, 1, 0], [], []>} : vector<8x8xbf16>, vector<8x8xbf16>, vector<8x8xf32> -> vector<8x8xf32>
      %c3_205 = arith.constant 3 : index
      %c0_206 = arith.constant 0 : index
      %c0_207 = arith.constant 0 : index
      %335 = vector.load %arg8[%c3_205, %c0_206, %c0_207] : memref<4x8x1xf32, #tpu.memory_space<vmem>>, vector<1x8x1xf32>
      %336 = vector.shape_cast %335 : vector<1x8x1xf32> to vector<8x1xf32>
      %cst_208 = arith.constant dense<0xFF800000> : vector<8xf32>
      %337 = vector.multi_reduction <maximumf>, %334, %cst_208 [1] : vector<8x8xf32> to vector<8xf32>
      %338 = vector.shape_cast %337 : vector<8xf32> to vector<8x1xf32>
      %339 = arith.maximumf %336, %338 : vector<8x1xf32>
      %340 = arith.subf %336, %339 : vector<8x1xf32>
      %341 = math.exp %340 : vector<8x1xf32>
      %342 = vector.broadcast %339 : vector<8x1xf32> to vector<8x8xf32>
      %343 = arith.subf %334, %342 : vector<8x8xf32>
      %344 = math.exp %343 : vector<8x8xf32>
      %c3_209 = arith.constant 3 : index
      %c0_210 = arith.constant 0 : index
      %c0_211 = arith.constant 0 : index
      %345 = vector.load %arg9[%c3_209, %c0_210, %c0_211] : memref<4x8x1xf32, #tpu.memory_space<vmem>>, vector<1x8x1xf32>
      %346 = vector.shape_cast %345 : vector<1x8x1xf32> to vector<8x1xf32>
      %347 = arith.mulf %341, %346 : vector<8x1xf32>
      %cst_212 = arith.constant dense<0.000000e+00> : vector<8xf32>
      %348 = vector.multi_reduction <add>, %344, %cst_212 [1] : vector<8x8xf32> to vector<8xf32>
      %349 = vector.shape_cast %348 : vector<8xf32> to vector<8x1xf32>
      %350 = arith.addf %347, %349 : vector<8x1xf32>
      %c3_213 = arith.constant 3 : index
      %c0_214 = arith.constant 0 : index
      %c0_215 = arith.constant 0 : index
      %351 = vector.load %arg9[%c3_213, %c0_214, %c0_215] : memref<4x8x1xf32, #tpu.memory_space<vmem>>, vector<1x8x1xf32>
      %352 = vector.shape_cast %351 : vector<1x8x1xf32> to vector<8x1xf32>
      %353 = vector.shape_cast %350 : vector<8x1xf32> to vector<1x8x1xf32>
      tpu.vector_store %arg9[%c3_213, %c0_214, %c0_215], %353 {strides = array<i32>} : memref<4x8x1xf32, #tpu.memory_space<vmem>>, vector<1x8x1xf32>,
      %c0_216 = arith.constant 0 : index
      %c24_217 = arith.constant 24 : index
      %354 = vector.load %arg10[%c0_216, %c24_217] : memref<8x32xf32, #tpu.memory_space<vmem>>, vector<8x8xf32>
      %355 = vector.broadcast %341 : vector<8x1xf32> to vector<8x8xf32>
      %356 = arith.mulf %355, %354 : vector<8x8xf32>
      %357 = arith.truncf %344 : vector<8x8xf32> to vector<8x8xbf16>
      %cst_218 = arith.constant dense<0.000000e+00> : vector<8x8xf32>
      %358 = tpu.matmul %357, %332, %cst_218 {dimension_numbers = #tpu.dot_dimension_numbers<[1], [0], [0], [1], [0, 0, 1, 1], [], []>} : vector<8x8xbf16>, vector<8x8xbf16>, vector<8x8xf32> -> vector<8x8xf32>
      %359 = arith.addf %356, %358 : vector<8x8xf32>
      %c0_219 = arith.constant 0 : index
      %c24_220 = arith.constant 24 : index
      %360 = vector.load %arg10[%c0_219, %c24_220] : memref<8x32xf32, #tpu.memory_space<vmem>>, vector<8x8xf32>
      tpu.vector_store %arg10[%c0_219, %c24_220], %359 {strides = array<i32>} : memref<8x32xf32, #tpu.memory_space<vmem>>, vector<8x8xf32>,
      %c3_221 = arith.constant 3 : index
      %c0_222 = arith.constant 0 : index
      %c0_223 = arith.constant 0 : index
      %361 = vector.load %arg8[%c3_221, %c0_222, %c0_223] : memref<4x8x1xf32, #tpu.memory_space<vmem>>, vector<1x8x1xf32>
      %362 = vector.shape_cast %361 : vector<1x8x1xf32> to vector<8x1xf32>
      %363 = vector.shape_cast %339 : vector<8x1xf32> to vector<1x8x1xf32>
      tpu.vector_store %arg8[%c3_221, %c0_222, %c0_223], %363 {strides = array<i32>} : memref<4x8x1xf32, #tpu.memory_space<vmem>>, vector<1x8x1xf32>,
    }
    %c8_i32_16 = arith.constant 8 : i32
    %22 = arith.muli %arg1, %c8_i32_16 : i32
    %23 = tpu.assume_multiple %22, 8 : i32
    %c0_17 = arith.constant 0 : index
    %24 = arith.index_cast %23 : i32 to index
    %c0_18 = arith.constant 0 : index
    %25 = vector.load %arg2[%c0_17, %24, %c0_18] : memref<1x8x32xf32, #tpu.memory_space<vmem>>, vector<1x8x32xf32>
    %26 = vector.shape_cast %25 : vector<1x8x32xf32> to vector<8x32xf32>
    %27 = arith.truncf %26 : vector<8x32xf32> to vector<8x32xbf16>
    %c0_19 = arith.constant 0 : index
    %c0_20 = arith.constant 0 : index
    %28 = vector.load %arg4[%c0_19, %c0_20] : memref<32x64xbf16, #tpu.memory_space<vmem>>, vector<32x64xbf16>
    %cst_21 = arith.constant dense<0.000000e+00> : vector<8x64xf32>
    %29 = tpu.matmul %27, %28, %cst_21 {dimension_numbers = #tpu.dot_dimension_numbers<[1], [0], [0], [1], [0, 0, 1, 1], [], []>} : vector<8x32xbf16>, vector<32x64xbf16>, vector<8x64xf32> -> vector<8x64xf32>
    %30 = vector.extract_strided_slice %29 {offsets = [0, 0], sizes = [8, 8], strides = [1, 1]} : vector<8x64xf32> to vector<8x8xf32>
    %31 = arith.truncf %30 : vector<8x8xf32> to vector<8x8xbf16>
    %32 = vector.extract_strided_slice %29 {offsets = [0, 32], sizes = [8, 8], strides = [1, 1]} : vector<8x64xf32> to vector<8x8xf32>
    %33 = arith.truncf %32 : vector<8x8xf32> to vector<8x8xbf16>
    %34 = vector.extract_strided_slice %16 {offsets = [0, 0], sizes = [8, 8], strides = [1, 1]} : vector<8x32xbf16> to vector<8x8xbf16>
    %cst_22 = arith.constant dense<0.000000e+00> : vector<8x8xf32>
    %35 = tpu.matmul %34, %31, %cst_22 {dimension_numbers = #tpu.dot_dimension_numbers<[1], [1], [0], [0], [0, 0, 1, 0], [], []>} : vector<8x8xbf16>, vector<8x8xbf16>, vector<8x8xf32> -> vector<8x8xf32>
    %cst_23 = arith.constant -1.000000e+30 : f32
    %36 = vector.broadcast %cst_23 : f32 to vector<8x8xf32>
    %37 = arith.select %19, %35, %36 : vector<8x8xi1>, vector<8x8xf32>
    %c0_24 = arith.constant 0 : index
    %c0_25 = arith.constant 0 : index
    %c0_26 = arith.constant 0 : index
    %38 = vector.load %arg8[%c0_24, %c0_25, %c0_26] : memref<4x8x1xf32, #tpu.memory_space<vmem>>, vector<1x8x1xf32>
    %39 = vector.shape_cast %38 : vector<1x8x1xf32> to vector<8x1xf32>
    %cst_27 = arith.constant dense<0xFF800000> : vector<8xf32>
    %40 = vector.multi_reduction <maximumf>, %37, %cst_27 [1] : vector<8x8xf32> to vector<8xf32>
    %41 = vector.shape_cast %40 : vector<8xf32> to vector<8x1xf32>
    %42 = arith.maximumf %39, %41 : vector<8x1xf32>
    %43 = arith.subf %39, %42 : vector<8x1xf32>
    %44 = math.exp %43 : vector<8x1xf32>
    %45 = vector.broadcast %42 : vector<8x1xf32> to vector<8x8xf32>
    %46 = arith.subf %37, %45 : vector<8x8xf32>
    %47 = math.exp %46 : vector<8x8xf32>
    %c0_28 = arith.constant 0 : index
    %c0_29 = arith.constant 0 : index
    %c0_30 = arith.constant 0 : index
    %48 = vector.load %arg9[%c0_28, %c0_29, %c0_30] : memref<4x8x1xf32, #tpu.memory_space<vmem>>, vector<1x8x1xf32>
    %49 = vector.shape_cast %48 : vector<1x8x1xf32> to vector<8x1xf32>
    %50 = arith.mulf %44, %49 : vector<8x1xf32>
    %cst_31 = arith.constant dense<0.000000e+00> : vector<8xf32>
    %51 = vector.multi_reduction <add>, %47, %cst_31 [1] : vector<8x8xf32> to vector<8xf32>
    %52 = vector.shape_cast %51 : vector<8xf32> to vector<8x1xf32>
    %53 = arith.addf %50, %52 : vector<8x1xf32>
    %c0_32 = arith.constant 0 : index
    %c0_33 = arith.constant 0 : index
    %c0_34 = arith.constant 0 : index
    %54 = vector.load %arg9[%c0_32, %c0_33, %c0_34] : memref<4x8x1xf32, #tpu.memory_space<vmem>>, vector<1x8x1xf32>
    %55 = vector.shape_cast %54 : vector<1x8x1xf32> to vector<8x1xf32>
    %56 = vector.shape_cast %53 : vector<8x1xf32> to vector<1x8x1xf32>
    tpu.vector_store %arg9[%c0_32, %c0_33, %c0_34], %56 {strides = array<i32>} : memref<4x8x1xf32, #tpu.memory_space<vmem>>, vector<1x8x1xf32>,
    %c0_35 = arith.constant 0 : index
    %c0_36 = arith.constant 0 : index
    %57 = vector.load %arg10[%c0_35, %c0_36] : memref<8x32xf32, #tpu.memory_space<vmem>>, vector<8x8xf32>
    %58 = vector.broadcast %44 : vector<8x1xf32> to vector<8x8xf32>
    %59 = arith.mulf %58, %57 : vector<8x8xf32>
    %60 = arith.truncf %47 : vector<8x8xf32> to vector<8x8xbf16>
    %cst_37 = arith.constant dense<0.000000e+00> : vector<8x8xf32>
    %61 = tpu.matmul %60, %33, %cst_37 {dimension_numbers = #tpu.dot_dimension_numbers<[1], [0], [0], [1], [0, 0, 1, 1], [], []>} : vector<8x8xbf16>, vector<8x8xbf16>, vector<8x8xf32> -> vector<8x8xf32>
    %62 = arith.addf %59, %61 : vector<8x8xf32>
    %c0_38 = arith.constant 0 : index
    %c0_39 = arith.constant 0 : index
    %63 = vector.load %arg10[%c0_38, %c0_39] : memref<8x32xf32, #tpu.memory_space<vmem>>, vector<8x8xf32>
    tpu.vector_store %arg10[%c0_38, %c0_39], %62 {strides = array<i32>} : memref<8x32xf32, #tpu.memory_space<vmem>>, vector<8x8xf32>,
    %c0_40 = arith.constant 0 : index
    %c0_41 = arith.constant 0 : index
    %c0_42 = arith.constant 0 : index
    %64 = vector.load %arg8[%c0_40, %c0_41, %c0_42] : memref<4x8x1xf32, #tpu.memory_space<vmem>>, vector<1x8x1xf32>
    %65 = vector.shape_cast %64 : vector<1x8x1xf32> to vector<8x1xf32>
    %66 = vector.shape_cast %42 : vector<8x1xf32> to vector<1x8x1xf32>
    tpu.vector_store %arg8[%c0_40, %c0_41, %c0_42], %66 {strides = array<i32>} : memref<4x8x1xf32, #tpu.memory_space<vmem>>, vector<1x8x1xf32>,
    %67 = vector.extract_strided_slice %29 {offsets = [0, 8], sizes = [8, 8], strides = [1, 1]} : vector<8x64xf32> to vector<8x8xf32>
    %68 = arith.truncf %67 : vector<8x8xf32> to vector<8x8xbf16>
    %69 = vector.extract_strided_slice %29 {offsets = [0, 40], sizes = [8, 8], strides = [1, 1]} : vector<8x64xf32> to vector<8x8xf32>
    %70 = arith.truncf %69 : vector<8x8xf32> to vector<8x8xbf16>
    %71 = vector.extract_strided_slice %16 {offsets = [0, 8], sizes = [8, 8], strides = [1, 1]} : vector<8x32xbf16> to vector<8x8xbf16>
    %cst_43 = arith.constant dense<0.000000e+00> : vector<8x8xf32>
    %72 = tpu.matmul %71, %68, %cst_43 {dimension_numbers = #tpu.dot_dimension_numbers<[1], [1], [0], [0], [0, 0, 1, 0], [], []>} : vector<8x8xbf16>, vector<8x8xbf16>, vector<8x8xf32> -> vector<8x8xf32>
    %cst_44 = arith.constant -1.000000e+30 : f32
    %73 = vector.broadcast %cst_44 : f32 to vector<8x8xf32>
    %74 = arith.select %19, %72, %73 : vector<8x8xi1>, vector<8x8xf32>
    %c1 = arith.constant 1 : index
    %c0_45 = arith.constant 0 : index
    %c0_46 = arith.constant 0 : index
    %75 = vector.load %arg8[%c1, %c0_45, %c0_46] : memref<4x8x1xf32, #tpu.memory_space<vmem>>, vector<1x8x1xf32>
    %76 = vector.shape_cast %75 : vector<1x8x1xf32> to vector<8x1xf32>
    %cst_47 = arith.constant dense<0xFF800000> : vector<8xf32>
    %77 = vector.multi_reduction <maximumf>, %74, %cst_47 [1] : vector<8x8xf32> to vector<8xf32>
    %78 = vector.shape_cast %77 : vector<8xf32> to vector<8x1xf32>
    %79 = arith.maximumf %76, %78 : vector<8x1xf32>
    %80 = arith.subf %76, %79 : vector<8x1xf32>
    %81 = math.exp %80 : vector<8x1xf32>
    %82 = vector.broadcast %79 : vector<8x1xf32> to vector<8x8xf32>
    %83 = arith.subf %74, %82 : vector<8x8xf32>
    %84 = math.exp %83 : vector<8x8xf32>
    %c1_48 = arith.constant 1 : index
    %c0_49 = arith.constant 0 : index
    %c0_50 = arith.constant 0 : index
    %85 = vector.load %arg9[%c1_48, %c0_49, %c0_50] : memref<4x8x1xf32, #tpu.memory_space<vmem>>, vector<1x8x1xf32>
    %86 = vector.shape_cast %85 : vector<1x8x1xf32> to vector<8x1xf32>
    %87 = arith.mulf %81, %86 : vector<8x1xf32>
    %cst_51 = arith.constant dense<0.000000e+00> : vector<8xf32>
    %88 = vector.multi_reduction <add>, %84, %cst_51 [1] : vector<8x8xf32> to vector<8xf32>
    %89 = vector.shape_cast %88 : vector<8xf32> to vector<8x1xf32>
    %90 = arith.addf %87, %89 : vector<8x1xf32>
    %c1_52 = arith.constant 1 : index
    %c0_53 = arith.constant 0 : index
    %c0_54 = arith.constant 0 : index
    %91 = vector.load %arg9[%c1_52, %c0_53, %c0_54] : memref<4x8x1xf32, #tpu.memory_space<vmem>>, vector<1x8x1xf32>
    %92 = vector.shape_cast %91 : vector<1x8x1xf32> to vector<8x1xf32>
    %93 = vector.shape_cast %90 : vector<8x1xf32> to vector<1x8x1xf32>
    tpu.vector_store %arg9[%c1_52, %c0_53, %c0_54], %93 {strides = array<i32>} : memref<4x8x1xf32, #tpu.memory_space<vmem>>, vector<1x8x1xf32>,
    %c0_55 = arith.constant 0 : index
    %c8 = arith.constant 8 : index
    %94 = vector.load %arg10[%c0_55, %c8] : memref<8x32xf32, #tpu.memory_space<vmem>>, vector<8x8xf32>
    %95 = vector.broadcast %81 : vector<8x1xf32> to vector<8x8xf32>
    %96 = arith.mulf %95, %94 : vector<8x8xf32>
    %97 = arith.truncf %84 : vector<8x8xf32> to vector<8x8xbf16>
    %cst_56 = arith.constant dense<0.000000e+00> : vector<8x8xf32>
    %98 = tpu.matmul %97, %70, %cst_56 {dimension_numbers = #tpu.dot_dimension_numbers<[1], [0], [0], [1], [0, 0, 1, 1], [], []>} : vector<8x8xbf16>, vector<8x8xbf16>, vector<8x8xf32> -> vector<8x8xf32>
    %99 = arith.addf %96, %98 : vector<8x8xf32>
    %c0_57 = arith.constant 0 : index
    %c8_58 = arith.constant 8 : index
    %100 = vector.load %arg10[%c0_57, %c8_58] : memref<8x32xf32, #tpu.memory_space<vmem>>, vector<8x8xf32>
    tpu.vector_store %arg10[%c0_57, %c8_58], %99 {strides = array<i32>} : memref<8x32xf32, #tpu.memory_space<vmem>>, vector<8x8xf32>,
    %c1_59 = arith.constant 1 : index
    %c0_60 = arith.constant 0 : index
    %c0_61 = arith.constant 0 : index
    %101 = vector.load %arg8[%c1_59, %c0_60, %c0_61] : memref<4x8x1xf32, #tpu.memory_space<vmem>>, vector<1x8x1xf32>
    %102 = vector.shape_cast %101 : vector<1x8x1xf32> to vector<8x1xf32>
    %103 = vector.shape_cast %79 : vector<8x1xf32> to vector<1x8x1xf32>
    tpu.vector_store %arg8[%c1_59, %c0_60, %c0_61], %103 {strides = array<i32>} : memref<4x8x1xf32, #tpu.memory_space<vmem>>, vector<1x8x1xf32>,
    %104 = vector.extract_strided_slice %29 {offsets = [0, 16], sizes = [8, 8], strides = [1, 1]} : vector<8x64xf32> to vector<8x8xf32>
    %105 = arith.truncf %104 : vector<8x8xf32> to vector<8x8xbf16>
    %106 = vector.extract_strided_slice %29 {offsets = [0, 48], sizes = [8, 8], strides = [1, 1]} : vector<8x64xf32> to vector<8x8xf32>
    %107 = arith.truncf %106 : vector<8x8xf32> to vector<8x8xbf16>
    %108 = vector.extract_strided_slice %16 {offsets = [0, 16], sizes = [8, 8], strides = [1, 1]} : vector<8x32xbf16> to vector<8x8xbf16>
    %cst_62 = arith.constant dense<0.000000e+00> : vector<8x8xf32>
    %109 = tpu.matmul %108, %105, %cst_62 {dimension_numbers = #tpu.dot_dimension_numbers<[1], [1], [0], [0], [0, 0, 1, 0], [], []>} : vector<8x8xbf16>, vector<8x8xbf16>, vector<8x8xf32> -> vector<8x8xf32>
    %cst_63 = arith.constant -1.000000e+30 : f32
    %110 = vector.broadcast %cst_63 : f32 to vector<8x8xf32>
    %111 = arith.select %19, %109, %110 : vector<8x8xi1>, vector<8x8xf32>
    %c2 = arith.constant 2 : index
    %c0_64 = arith.constant 0 : index
    %c0_65 = arith.constant 0 : index
    %112 = vector.load %arg8[%c2, %c0_64, %c0_65] : memref<4x8x1xf32, #tpu.memory_space<vmem>>, vector<1x8x1xf32>
    %113 = vector.shape_cast %112 : vector<1x8x1xf32> to vector<8x1xf32>
    %cst_66 = arith.constant dense<0xFF800000> : vector<8xf32>
    %114 = vector.multi_reduction <maximumf>, %111, %cst_66 [1] : vector<8x8xf32> to vector<8xf32>
    %115 = vector.shape_cast %114 : vector<8xf32> to vector<8x1xf32>
    %116 = arith.maximumf %113, %115 : vector<8x1xf32>
    %117 = arith.subf %113, %116 : vector<8x1xf32>
    %118 = math.exp %117 : vector<8x1xf32>
    %119 = vector.broadcast %116 : vector<8x1xf32> to vector<8x8xf32>
    %120 = arith.subf %111, %119 : vector<8x8xf32>
    %121 = math.exp %120 : vector<8x8xf32>
    %c2_67 = arith.constant 2 : index
    %c0_68 = arith.constant 0 : index
    %c0_69 = arith.constant 0 : index
    %122 = vector.load %arg9[%c2_67, %c0_68, %c0_69] : memref<4x8x1xf32, #tpu.memory_space<vmem>>, vector<1x8x1xf32>
    %123 = vector.shape_cast %122 : vector<1x8x1xf32> to vector<8x1xf32>
    %124 = arith.mulf %118, %123 : vector<8x1xf32>
    %cst_70 = arith.constant dense<0.000000e+00> : vector<8xf32>
    %125 = vector.multi_reduction <add>, %121, %cst_70 [1] : vector<8x8xf32> to vector<8xf32>
    %126 = vector.shape_cast %125 : vector<8xf32> to vector<8x1xf32>
    %127 = arith.addf %124, %126 : vector<8x1xf32>
    %c2_71 = arith.constant 2 : index
    %c0_72 = arith.constant 0 : index
    %c0_73 = arith.constant 0 : index
    %128 = vector.load %arg9[%c2_71, %c0_72, %c0_73] : memref<4x8x1xf32, #tpu.memory_space<vmem>>, vector<1x8x1xf32>
    %129 = vector.shape_cast %128 : vector<1x8x1xf32> to vector<8x1xf32>
    %130 = vector.shape_cast %127 : vector<8x1xf32> to vector<1x8x1xf32>
    tpu.vector_store %arg9[%c2_71, %c0_72, %c0_73], %130 {strides = array<i32>} : memref<4x8x1xf32, #tpu.memory_space<vmem>>, vector<1x8x1xf32>,
    %c0_74 = arith.constant 0 : index
    %c16 = arith.constant 16 : index
    %131 = vector.load %arg10[%c0_74, %c16] : memref<8x32xf32, #tpu.memory_space<vmem>>, vector<8x8xf32>
    %132 = vector.broadcast %118 : vector<8x1xf32> to vector<8x8xf32>
    %133 = arith.mulf %132, %131 : vector<8x8xf32>
    %134 = arith.truncf %121 : vector<8x8xf32> to vector<8x8xbf16>
    %cst_75 = arith.constant dense<0.000000e+00> : vector<8x8xf32>
    %135 = tpu.matmul %134, %107, %cst_75 {dimension_numbers = #tpu.dot_dimension_numbers<[1], [0], [0], [1], [0, 0, 1, 1], [], []>} : vector<8x8xbf16>, vector<8x8xbf16>, vector<8x8xf32> -> vector<8x8xf32>
    %136 = arith.addf %133, %135 : vector<8x8xf32>
    %c0_76 = arith.constant 0 : index
    %c16_77 = arith.constant 16 : index
    %137 = vector.load %arg10[%c0_76, %c16_77] : memref<8x32xf32, #tpu.memory_space<vmem>>, vector<8x8xf32>
    tpu.vector_store %arg10[%c0_76, %c16_77], %136 {strides = array<i32>} : memref<8x32xf32, #tpu.memory_space<vmem>>, vector<8x8xf32>,
    %c2_78 = arith.constant 2 : index
    %c0_79 = arith.constant 0 : index
    %c0_80 = arith.constant 0 : index
    %138 = vector.load %arg8[%c2_78, %c0_79, %c0_80] : memref<4x8x1xf32, #tpu.memory_space<vmem>>, vector<1x8x1xf32>
    %139 = vector.shape_cast %138 : vector<1x8x1xf32> to vector<8x1xf32>
    %140 = vector.shape_cast %116 : vector<8x1xf32> to vector<1x8x1xf32>
    tpu.vector_store %arg8[%c2_78, %c0_79, %c0_80], %140 {strides = array<i32>} : memref<4x8x1xf32, #tpu.memory_space<vmem>>, vector<1x8x1xf32>,
    %141 = vector.extract_strided_slice %29 {offsets = [0, 24], sizes = [8, 8], strides = [1, 1]} : vector<8x64xf32> to vector<8x8xf32>
    %142 = arith.truncf %141 : vector<8x8xf32> to vector<8x8xbf16>
    %143 = vector.extract_strided_slice %29 {offsets = [0, 56], sizes = [8, 8], strides = [1, 1]} : vector<8x64xf32> to vector<8x8xf32>
    %144 = arith.truncf %143 : vector<8x8xf32> to vector<8x8xbf16>
    %145 = vector.extract_strided_slice %16 {offsets = [0, 24], sizes = [8, 8], strides = [1, 1]} : vector<8x32xbf16> to vector<8x8xbf16>
    %cst_81 = arith.constant dense<0.000000e+00> : vector<8x8xf32>
    %146 = tpu.matmul %145, %142, %cst_81 {dimension_numbers = #tpu.dot_dimension_numbers<[1], [1], [0], [0], [0, 0, 1, 0], [], []>} : vector<8x8xbf16>, vector<8x8xbf16>, vector<8x8xf32> -> vector<8x8xf32>
    %cst_82 = arith.constant -1.000000e+30 : f32
    %147 = vector.broadcast %cst_82 : f32 to vector<8x8xf32>
    %148 = arith.select %19, %146, %147 : vector<8x8xi1>, vector<8x8xf32>
    %c3 = arith.constant 3 : index
    %c0_83 = arith.constant 0 : index
    %c0_84 = arith.constant 0 : index
    %149 = vector.load %arg8[%c3, %c0_83, %c0_84] : memref<4x8x1xf32, #tpu.memory_space<vmem>>, vector<1x8x1xf32>
    %150 = vector.shape_cast %149 : vector<1x8x1xf32> to vector<8x1xf32>
    %cst_85 = arith.constant dense<0xFF800000> : vector<8xf32>
    %151 = vector.multi_reduction <maximumf>, %148, %cst_85 [1] : vector<8x8xf32> to vector<8xf32>
    %152 = vector.shape_cast %151 : vector<8xf32> to vector<8x1xf32>
    %153 = arith.maximumf %150, %152 : vector<8x1xf32>
    %154 = arith.subf %150, %153 : vector<8x1xf32>
    %155 = math.exp %154 : vector<8x1xf32>
    %156 = vector.broadcast %153 : vector<8x1xf32> to vector<8x8xf32>
    %157 = arith.subf %148, %156 : vector<8x8xf32>
    %158 = math.exp %157 : vector<8x8xf32>
    %c3_86 = arith.constant 3 : index
    %c0_87 = arith.constant 0 : index
    %c0_88 = arith.constant 0 : index
    %159 = vector.load %arg9[%c3_86, %c0_87, %c0_88] : memref<4x8x1xf32, #tpu.memory_space<vmem>>, vector<1x8x1xf32>
    %160 = vector.shape_cast %159 : vector<1x8x1xf32> to vector<8x1xf32>
    %161 = arith.mulf %155, %160 : vector<8x1xf32>
    %cst_89 = arith.constant dense<0.000000e+00> : vector<8xf32>
    %162 = vector.multi_reduction <add>, %158, %cst_89 [1] : vector<8x8xf32> to vector<8xf32>
    %163 = vector.shape_cast %162 : vector<8xf32> to vector<8x1xf32>
    %164 = arith.addf %161, %163 : vector<8x1xf32>
    %c3_90 = arith.constant 3 : index
    %c0_91 = arith.constant 0 : index
    %c0_92 = arith.constant 0 : index
    %165 = vector.load %arg9[%c3_90, %c0_91, %c0_92] : memref<4x8x1xf32, #tpu.memory_space<vmem>>, vector<1x8x1xf32>
    %166 = vector.shape_cast %165 : vector<1x8x1xf32> to vector<8x1xf32>
    %167 = vector.shape_cast %164 : vector<8x1xf32> to vector<1x8x1xf32>
    tpu.vector_store %arg9[%c3_90, %c0_91, %c0_92], %167 {strides = array<i32>} : memref<4x8x1xf32, #tpu.memory_space<vmem>>, vector<1x8x1xf32>,
    %c0_93 = arith.constant 0 : index
    %c24 = arith.constant 24 : index
    %168 = vector.load %arg10[%c0_93, %c24] : memref<8x32xf32, #tpu.memory_space<vmem>>, vector<8x8xf32>
    %169 = vector.broadcast %155 : vector<8x1xf32> to vector<8x8xf32>
    %170 = arith.mulf %169, %168 : vector<8x8xf32>
    %171 = arith.truncf %158 : vector<8x8xf32> to vector<8x8xbf16>
    %cst_94 = arith.constant dense<0.000000e+00> : vector<8x8xf32>
    %172 = tpu.matmul %171, %144, %cst_94 {dimension_numbers = #tpu.dot_dimension_numbers<[1], [0], [0], [1], [0, 0, 1, 1], [], []>} : vector<8x8xbf16>, vector<8x8xbf16>, vector<8x8xf32> -> vector<8x8xf32>
    %173 = arith.addf %170, %172 : vector<8x8xf32>
    %c0_95 = arith.constant 0 : index
    %c24_96 = arith.constant 24 : index
    %174 = vector.load %arg10[%c0_95, %c24_96] : memref<8x32xf32, #tpu.memory_space<vmem>>, vector<8x8xf32>
    tpu.vector_store %arg10[%c0_95, %c24_96], %173 {strides = array<i32>} : memref<8x32xf32, #tpu.memory_space<vmem>>, vector<8x8xf32>,
    %c3_97 = arith.constant 3 : index
    %c0_98 = arith.constant 0 : index
    %c0_99 = arith.constant 0 : index
    %175 = vector.load %arg8[%c3_97, %c0_98, %c0_99] : memref<4x8x1xf32, #tpu.memory_space<vmem>>, vector<1x8x1xf32>
    %176 = vector.shape_cast %175 : vector<1x8x1xf32> to vector<8x1xf32>
    %177 = vector.shape_cast %153 : vector<8x1xf32> to vector<1x8x1xf32>
    tpu.vector_store %arg8[%c3_97, %c0_98, %c0_99], %177 {strides = array<i32>} : memref<4x8x1xf32, #tpu.memory_space<vmem>>, vector<1x8x1xf32>,
    %c0_100 = arith.constant 0 : index
    %c0_101 = arith.constant 0 : index
    %c0_102 = arith.constant 0 : index
    %178 = vector.load %arg9[%c0_100, %c0_101, %c0_102] : memref<4x8x1xf32, #tpu.memory_space<vmem>>, vector<1x8x1xf32>
    %179 = vector.shape_cast %178 : vector<1x8x1xf32> to vector<8x1xf32>
    %180 = tpu.reciprocal %179 {approx = true} : vector<8x1xf32> -> vector<8x1xf32>
    %c0_103 = arith.constant 0 : index
    %c0_104 = arith.constant 0 : index
    %181 = vector.load %arg10[%c0_103, %c0_104] : memref<8x32xf32, #tpu.memory_space<vmem>>, vector<8x8xf32>
    %182 = vector.broadcast %180 : vector<8x1xf32> to vector<8x8xf32>
    %183 = arith.mulf %181, %182 : vector<8x8xf32>
    %c0_105 = arith.constant 0 : index
    %c0_106 = arith.constant 0 : index
    %184 = vector.load %arg10[%c0_105, %c0_106] : memref<8x32xf32, #tpu.memory_space<vmem>>, vector<8x8xf32>
    tpu.vector_store %arg10[%c0_105, %c0_106], %183 {strides = array<i32>} : memref<8x32xf32, #tpu.memory_space<vmem>>, vector<8x8xf32>,
    %c1_107 = arith.constant 1 : index
    %c0_108 = arith.constant 0 : index
    %c0_109 = arith.constant 0 : index
    %185 = vector.load %arg9[%c1_107, %c0_108, %c0_109] : memref<4x8x1xf32, #tpu.memory_space<vmem>>, vector<1x8x1xf32>
    %186 = vector.shape_cast %185 : vector<1x8x1xf32> to vector<8x1xf32>
    %187 = tpu.reciprocal %186 {approx = true} : vector<8x1xf32> -> vector<8x1xf32>
    %c0_110 = arith.constant 0 : index
    %c8_111 = arith.constant 8 : index
    %188 = vector.load %arg10[%c0_110, %c8_111] : memref<8x32xf32, #tpu.memory_space<vmem>>, vector<8x8xf32>
    %189 = vector.broadcast %187 : vector<8x1xf32> to vector<8x8xf32>
    %190 = arith.mulf %188, %189 : vector<8x8xf32>
    %c0_112 = arith.constant 0 : index
    %c8_113 = arith.constant 8 : index
    %191 = vector.load %arg10[%c0_112, %c8_113] : memref<8x32xf32, #tpu.memory_space<vmem>>, vector<8x8xf32>
    tpu.vector_store %arg10[%c0_112, %c8_113], %190 {strides = array<i32>} : memref<8x32xf32, #tpu.memory_space<vmem>>, vector<8x8xf32>,
    %c2_114 = arith.constant 2 : index
    %c0_115 = arith.constant 0 : index
    %c0_116 = arith.constant 0 : index
    %192 = vector.load %arg9[%c2_114, %c0_115, %c0_116] : memref<4x8x1xf32, #tpu.memory_space<vmem>>, vector<1x8x1xf32>
    %193 = vector.shape_cast %192 : vector<1x8x1xf32> to vector<8x1xf32>
    %194 = tpu.reciprocal %193 {approx = true} : vector<8x1xf32> -> vector<8x1xf32>
    %c0_117 = arith.constant 0 : index
    %c16_118 = arith.constant 16 : index
    %195 = vector.load %arg10[%c0_117, %c16_118] : memref<8x32xf32, #tpu.memory_space<vmem>>, vector<8x8xf32>
    %196 = vector.broadcast %194 : vector<8x1xf32> to vector<8x8xf32>
    %197 = arith.mulf %195, %196 : vector<8x8xf32>
    %c0_119 = arith.constant 0 : index
    %c16_120 = arith.constant 16 : index
    %198 = vector.load %arg10[%c0_119, %c16_120] : memref<8x32xf32, #tpu.memory_space<vmem>>, vector<8x8xf32>
    tpu.vector_store %arg10[%c0_119, %c16_120], %197 {strides = array<i32>} : memref<8x32xf32, #tpu.memory_space<vmem>>, vector<8x8xf32>,
    %c3_121 = arith.constant 3 : index
    %c0_122 = arith.constant 0 : index
    %c0_123 = arith.constant 0 : index
    %199 = vector.load %arg9[%c3_121, %c0_122, %c0_123] : memref<4x8x1xf32, #tpu.memory_space<vmem>>, vector<1x8x1xf32>
    %200 = vector.shape_cast %199 : vector<1x8x1xf32> to vector<8x1xf32>
    %201 = tpu.reciprocal %200 {approx = true} : vector<8x1xf32> -> vector<8x1xf32>
    %c0_124 = arith.constant 0 : index
    %c24_125 = arith.constant 24 : index
    %202 = vector.load %arg10[%c0_124, %c24_125] : memref<8x32xf32, #tpu.memory_space<vmem>>, vector<8x8xf32>
    %203 = vector.broadcast %201 : vector<8x1xf32> to vector<8x8xf32>
    %204 = arith.mulf %202, %203 : vector<8x8xf32>
    %c0_126 = arith.constant 0 : index
    %c24_127 = arith.constant 24 : index
    %205 = vector.load %arg10[%c0_126, %c24_127] : memref<8x32xf32, #tpu.memory_space<vmem>>, vector<8x8xf32>
    tpu.vector_store %arg10[%c0_126, %c24_127], %204 {strides = array<i32>} : memref<8x32xf32, #tpu.memory_space<vmem>>, vector<8x8xf32>,
    %c0_128 = arith.constant 0 : index
    %c0_129 = arith.constant 0 : index
    %206 = vector.load %arg10[%c0_128, %c0_129] : memref<8x32xf32, #tpu.memory_space<vmem>>, vector<8x32xf32>
    %207 = arith.truncf %206 : vector<8x32xf32> to vector<8x32xbf16>
    %c0_130 = arith.constant 0 : index
    %c0_131 = arith.constant 0 : index
    %208 = vector.load %arg5[%c0_130, %c0_131] : memref<32x32xbf16, #tpu.memory_space<vmem>>, vector<32x32xbf16>
    %cst_132 = arith.constant dense<0.000000e+00> : vector<8x32xf32>
    %209 = tpu.matmul %207, %208, %cst_132 {dimension_numbers = #tpu.dot_dimension_numbers<[1], [0], [0], [1], [0, 0, 1, 1], [], []>} : vector<8x32xbf16>, vector<32x32xbf16>, vector<8x32xf32> -> vector<8x32xf32>
    %c0_133 = arith.constant 0 : index
    %c0_134 = arith.constant 0 : index
    %210 = vector.load %arg6[%c0_133, %c0_134] : memref<1x32xf32, #tpu.memory_space<vmem>>, vector<1x32xf32>
    %211 = vector.broadcast %210 : vector<1x32xf32> to vector<8x32xf32>
    %212 = arith.addf %209, %211 : vector<8x32xf32>
    %c0_135 = arith.constant 0 : index
    %c0_136 = arith.constant 0 : index
    %c0_137 = arith.constant 0 : index
    %213 = vector.load %arg7[%c0_135, %c0_136, %c0_137] : memref<1x8x32xf32, #tpu.memory_space<vmem>>, vector<1x8x32xf32>
    %214 = vector.shape_cast %213 : vector<1x8x32xf32> to vector<8x32xf32>
    %215 = vector.shape_cast %212 : vector<8x32xf32> to vector<1x8x32xf32>
    tpu.vector_store %arg7[%c0_135, %c0_136, %c0_137], %215 {strides = array<i32>} : memref<1x8x32xf32, #tpu.memory_space<vmem>>, vector<1x8x32xf32>,
    return
  }
  func.func @transform_0(%arg0: i32, %arg1: i32) -> (i32, i32, i32) {
    %c0_i32 = arith.constant 0 : i32
    %c0_i32_0 = arith.constant 0 : i32
    %c0_i32_1 = arith.constant 0 : i32
    return %arg0, %c0_i32, %c0_i32_0 : i32, i32, i32
  }
  func.func @transform_1(%arg0: i32, %arg1: i32) -> (i32, i32) {
    %c0_i32 = arith.constant 0 : i32
    %c0_i32_0 = arith.constant 0 : i32
    %c0_i32_1 = arith.constant 0 : i32
    return %c0_i32, %c0_i32_0 : i32, i32
  }
  func.func @transform_2(%arg0: i32, %arg1: i32) -> (i32, i32) {
    %c0_i32 = arith.constant 0 : i32
    %c0_i32_0 = arith.constant 0 : i32
    %c0_i32_1 = arith.constant 0 : i32
    return %c0_i32, %c0_i32_0 : i32, i32
  }
  func.func @transform_3(%arg0: i32, %arg1: i32) -> (i32, i32) {
    %c0_i32 = arith.constant 0 : i32
    %c0_i32_0 = arith.constant 0 : i32
    %c0_i32_1 = arith.constant 0 : i32
    return %c0_i32, %c0_i32_0 : i32, i32
  }
  func.func @transform_4(%arg0: i32, %arg1: i32) -> (i32, i32) {
    %c0_i32 = arith.constant 0 : i32
    %c0_i32_0 = arith.constant 0 : i32
    %c0_i32_1 = arith.constant 0 : i32
    return %c0_i32, %c0_i32_0 : i32, i32
  }
  func.func @transform_5(%arg0: i32, %arg1: i32) -> (i32, i32, i32) {
    %c0_i32 = arith.constant 0 : i32
    %c0_i32_0 = arith.constant 0 : i32
    return %arg0, %arg1, %c0_i32 : i32, i32, i32
  }
}

</mosaic_0001>

<llo_original>
// kernel: tpu_custom_call.1
$region0: #{tpu_custom_call.1}
  #allocation0 [shape = 'u32[]', space=smem, size = 0x4, offset = 0x4, fixed_abs, tag = 'smem constant byte address 0x4 - core index']
  #allocation1 [shape = 'u32[144,128]{1,0:T(1,128)}', space=vmem, size = 0x12000, scoped, tag = 'internal scratch']
  #allocation2 [shape = 'f32[4,8,1]{2,1,0:T(8,128)}', space=vmem, size = 0x4000, scoped, tag = 'scratch operand']
  #allocation3 [shape = 'f32[4,8,1]{2,1,0:T(8,128)}', space=vmem, size = 0x4000, scoped, tag = 'scratch operand']
  #allocation4 [shape = 'f32[8,32]{1,0:T(8,128)}', space=vmem, size = 0x1000, scoped, tag = 'scratch operand']
  %s0 = inlined_call_operand.hbm [shape: f32[2,8,32], index: 0, kind: input, shape index: {}]
  %s1 = inlined_call_operand.hbm [shape: bf16[32,32], index: 1, kind: input, shape index: {}]
  %s2 = inlined_call_operand.hbm [shape: bf16[32,64], index: 2, kind: input, shape index: {}]
  %s3 = inlined_call_operand.hbm [shape: bf16[32,32], index: 3, kind: input, shape index: {}]
  %s4 = inlined_call_operand.vmem [shape: f32[1,32], index: 4, kind: input, shape index: {}]
  %s5 = inlined_call_operand.hbm [shape: f32[2,8,32], index: 5, kind: output, shape index: {}]
  %s6 = sld [smem:[#allocation0]]
  $region76: #{tpu_custom_call.1} parent=0
    _
  %s8 = ssub.s32 1, %s6
  %s9 = scalar_select 0, %s8, %s6
  $region1: #{tpu_custom_call.1} parent=0
    #allocation5 [shape = 'u8[8192]{0}', space=vmem, size = 0x2000, scoped, tag = 'input window, operand 0']
    #allocation6 [shape = 's32[2]{0}', space=sflag, size = 0x8, scoped, tag = 'scoped memory for tpu_custom_call.1']
    #allocation7 [shape = 's32[2]{0}', space=sflag, size = 0x8, scoped, tag = 'scoped memory for tpu_custom_call.1']
    #allocation8 [shape = 'u8[8192]{0}', space=vmem, size = 0x2000, scoped, tag = 'input window, operand 1, single buffered']
    #allocation9 [shape = 's32[1]{0}', space=sflag, size = 0x4, scoped, tag = 'scoped memory for tpu_custom_call.1']
    #allocation10 [shape = 'u8[8192]{0}', space=vmem, size = 0x2000, scoped, tag = 'input window, operand 2, single buffered']
    #allocation11 [shape = 'u8[8192]{0}', space=vmem, size = 0x2000, scoped, tag = 'input window, operand 3, single buffered']
    #allocation12 [shape = 's32[1]{0}', space=sflag, size = 0x4, scoped, tag = 'scoped memory for tpu_custom_call.1']
    #allocation13 [shape = 'u8[8192]{0}', space=vmem, size = 0x2000, scoped, tag = 'output window, operand 0']
    %10 = vsyncpa [#allocation6], 0
    %s11 = scalar_lea.sflag [#allocation6], 1
    %12 = vsyncpa %s11, 0
    %13 = vsyncpa [#allocation9], 0
    %14 = vsyncpa [#allocation12], 0
    %15 = vsyncpa [#allocation7], 0
    %s16 = scalar_lea.sflag [#allocation7], 1
    %17 = vsyncpa %s16, 0
    loop: start=0, step=1, limit=4
    $region2: #{tpu_custom_call.1} parent=1 // loop_pre_header
      _
    $region3: #{tpu_custom_call.1} parent=1 // loop_header
      %s19 = sphi 0, %s23
      %p20 = scmp.ge.s32.totalorder %s19, 4
      %s26 = sphi 0, %s38
      %s27 = sphi 0, %s34
      %s28 = sphi 0, %s26
      %s29 = sphi 0, %s27
      %s30 = sphi 0, %s28
      %s31 = sphi 0, %s29
      %s41 = sphi 0, %s43
      %s44 = sphi 0, %s41
      %s45 = sphi 0, %s44
      %s61 = sphi 0, %s45
      %s65 = sphi 0, %s65
      %s67 = sphi 0, %s65
      %s68 = sphi 0, %s67
      %s82 = sphi 0, %s68
      %s86 = sphi 0, %s86
      %s88 = sphi 0, %s86
      %s89 = sphi 0, %s88
      %s103 = sphi 0, %s89
      %s107 = sphi 0, %s107
      %s109 = sphi 0, %s107
      %s110 = sphi 0, %s109
      %s124 = sphi 0, %s110
      %s128 = sphi 0, %s128
      %s130 = sphi 0, %s128
      %s131 = sphi 0, %s130
      %s145 = sphi 0, %s131
      %s153 = sphi 0, %s155
      %s156 = sphi 0, %s153
      %s157 = sphi 0, %s156
      %s173 = sphi 0, %s157
    $region4: #{tpu_custom_call.1} parent=1 // loop_header_branch
      %22 = sbr.rel (%p20) target = $region8
    $region5: #{tpu_custom_call.1} parent=1 // loop_body
      %s24 = ssub.s32 %s19, 1
      %s25 = ssub.s32 %s19, 2
      %s32 = sadd.s32 1, %s27
      %p33 = scmp.ge.s32.totalorder %s32, 1
      %s34 = scalar_select %p33, 0, %s32
      %s35 = sadd.s32 1, %s26
      %s36 = scalar_select %p33, %s35, %s26
      %p37 = scmp.ge.s32.totalorder %s36, 2
      %s38 = scalar_select %p37, 0, %s36
      %s39 = ssub.s32 %s26, %s38
      %p40 = scmp.eq.s32.totalorder %s39, 0
      %s42 = sadd.s32 %s41, 1
      %s43 = scalar_select %p40, %s41, %s42
      %p46 = pneg %p40
      %p47 = scmp.eq.s32.totalorder %s19, 1
      %p48 = por %p46, %p47
      %p49 = scmp.ne.s32.totalorder %s41, %s44
      %p50 = scmp.eq.s32.totalorder %s19, 0
      %p51 = por %p49, %p50
      %p52 = scmp.ne.s32.totalorder %s41, %s44
      %p53 = scmp.eq.s32.totalorder %s24, 1
      %p54 = por %p52, %p53
      %p55 = scmp.ne.s32.totalorder %s44, %s45
      %p56 = scmp.eq.s32.totalorder %s24, 0
      %p57 = por %p55, %p56
      %p58 = scmp.ne.s32.totalorder %s44, %s45
      %p59 = scmp.eq.s32.totalorder %s25, 1
      %p60 = por %p58, %p59
      %p62 = scmp.ne.s32.totalorder %s45, %s61
      %p63 = scmp.eq.s32.totalorder %s25, 0
      %p64 = por %p62, %p63
      %s66 = sadd.s32 %s65, 1
      %p69 = scmp.eq.s32.totalorder %s19, 1
      %p70 = scmp.ne.s32.totalorder %s65, %s67
      %p71 = scmp.eq.s32.totalorder %s19, 0
      %p72 = por %p70, %p71
      %p73 = scmp.ne.s32.totalorder %s65, %s67
      %p74 = scmp.eq.s32.totalorder %s24, 1
      %p75 = por %p73, %p74
      %p76 = scmp.ne.s32.totalorder %s67, %s68
      %p77 = scmp.eq.s32.totalorder %s24, 0
      %p78 = por %p76, %p77
      %p79 = scmp.ne.s32.totalorder %s67, %s68
      %p80 = scmp.eq.s32.totalorder %s25, 1
      %p81 = por %p79, %p80
      %p83 = scmp.ne.s32.totalorder %s68, %s82
      %p84 = scmp.eq.s32.totalorder %s25, 0
      %p85 = por %p83, %p84
      %s87 = sadd.s32 %s86, 1
      %p90 = scmp.eq.s32.totalorder %s19, 1
      %p91 = scmp.ne.s32.totalorder %s86, %s88
      %p92 = scmp.eq.s32.totalorder %s19, 0
      %p93 = por %p91, %p92
      %p94 = scmp.ne.s32.totalorder %s86, %s88
      %p95 = scmp.eq.s32.totalorder %s24, 1
      %p96 = por %p94, %p95
      %p97 = scmp.ne.s32.totalorder %s88, %s89
      %p98 = scmp.eq.s32.totalorder %s24, 0
      %p99 = por %p97, %p98
      %p100 = scmp.ne.s32.totalorder %s88, %s89
      %p101 = scmp.eq.s32.totalorder %s25, 1
      %p102 = por %p100, %p101
      %p104 = scmp.ne.s32.totalorder %s89, %s103
      %p105 = scmp.eq.s32.totalorder %s25, 0
      %p106 = por %p104, %p105
      %s108 = sadd.s32 %s107, 1
      %p111 = scmp.eq.s32.totalorder %s19, 1
      %p112 = scmp.ne.s32.totalorder %s107, %s109
      %p113 = scmp.eq.s32.totalorder %s19, 0
      %p114 = por %p112, %p113
      %p115 = scmp.ne.s32.totalorder %s107, %s109
      %p116 = scmp.eq.s32.totalorder %s24, 1
      %p117 = por %p115, %p116
      %p118 = scmp.ne.s32.totalorder %s109, %s110
      %p119 = scmp.eq.s32.totalorder %s24, 0
      %p120 = por %p118, %p119
      %p121 = scmp.ne.s32.totalorder %s109, %s110
      %p122 = scmp.eq.s32.totalorder %s25, 1
      %p123 = por %p121, %p122
      %p125 = scmp.ne.s32.totalorder %s110, %s124
      %p126 = scmp.eq.s32.totalorder %s25, 0
      %p127 = por %p125, %p126
      %s129 = sadd.s32 %s128, 1
      %p132 = scmp.eq.s32.totalorder %s19, 1
      %p133 = scmp.ne.s32.totalorder %s128, %s130
      %p134 = scmp.eq.s32.totalorder %s19, 0
      %p135 = por %p133, %p134
      %p136 = scmp.ne.s32.totalorder %s128, %s130
      %p137 = scmp.eq.s32.totalorder %s24, 1
      %p138 = por %p136, %p137
      %p139 = scmp.ne.s32.totalorder %s130, %s131
      %p140 = scmp.eq.s32.totalorder %s24, 0
      %p141 = por %p139, %p140
      %p142 = scmp.ne.s32.totalorder %s130, %s131
      %p143 = scmp.eq.s32.totalorder %s25, 1
      %p144 = por %p142, %p143
      %p146 = scmp.ne.s32.totalorder %s131, %s145
      %p147 = scmp.eq.s32.totalorder %s25, 0
      %p148 = por %p146, %p147
      %s149 = ssub.s32 %s26, %s38
      %s150 = ssub.s32 %s27, %s34
      %s151 = sor.u32 %s149, %s150
      %p152 = scmp.eq.s32.totalorder %s151, 0
      %s154 = sadd.s32 %s153, 1
      %s155 = scalar_select %p152, %s153, %s154
      %p158 = pneg %p152
      %p159 = scmp.eq.s32.totalorder %s19, 1
      %p160 = por %p158, %p159
      %p161 = scmp.ne.s32.totalorder %s153, %s156
      %p162 = scmp.eq.s32.totalorder %s19, 0
      %p163 = por %p161, %p162
      %p164 = scmp.ne.s32.totalorder %s153, %s156
      %p165 = scmp.eq.s32.totalorder %s24, 1
      %p166 = por %p164, %p165
      %p167 = scmp.ne.s32.totalorder %s156, %s157
      %p168 = scmp.eq.s32.totalorder %s24, 0
      %p169 = por %p167, %p168
      %p170 = scmp.ne.s32.totalorder %s156, %s157
      %p171 = scmp.eq.s32.totalorder %s25, 1
      %p172 = por %p170, %p171
      %p174 = scmp.ne.s32.totalorder %s157, %s173
      %p175 = scmp.eq.s32.totalorder %s25, 0
      %p176 = por %p174, %p175
      %p177 = scmp.le.s32.totalorder 1, %s19
      %p178 = scmp.lt.s32.totalorder %s19, 3
      %p179 = pnand %p177, %p178
      %p180 = pneg %p179
      // Predicated region
      $region9: #{tpu_custom_call.1} parent=5 // pred_check
        _
      $region10: #{tpu_custom_call.1} parent=5 // pred_check_branch
        %182 = sbr.rel (%p179) target = $region12
      $region11: #{tpu_custom_call.1} parent=5 // pred_region
        %s183 = ssub.s32 %s19, 1
        // Predicated region
        $region13: #{tpu_custom_call.1} parent=11 // pred_check
          %p184 = pneg %p78
        $region14: #{tpu_custom_call.1} parent=11 // pred_check_branch
          %186 = sbr.rel (%p184) target = $region16
        $region15: #{tpu_custom_call.1} parent=11 // pred_region
          %s188 = ssub.s32 256, 256
          %189 = vsyncadd [#allocation9], %s188
          %s190 = sshll.u32 [#allocation8], 4
          %s191 = int_to_ptr.vmem [resolvable:$true] %s190
          %196 = dma.hbm_to_vmem [thread:$0]  %s1, 256, %s191, [#allocation9], 64, 64, 4
        $region16: #{tpu_custom_call.1} parent=11 // pred_fallthru
          _
        // Predicated region
        $region17: #{tpu_custom_call.1} parent=11 // pred_check
          %p197 = pneg %p99
        $region18: #{tpu_custom_call.1} parent=11 // pred_check_branch
          %199 = sbr.rel (%p197) target = $region20
        $region19: #{tpu_custom_call.1} parent=11 // pred_region
          %s201 = ssub.s32 256, 256
          %202 = vsyncadd [#allocation9], %s201
          %s203 = sshll.u32 [#allocation10], 4
          %s204 = int_to_ptr.vmem [resolvable:$true] %s203
          %209 = dma.hbm_to_vmem [thread:$0]  %s2, 256, %s204, [#allocation9], 64, 64, 4
        $region20: #{tpu_custom_call.1} parent=11 // pred_fallthru
          _
        // Predicated region
        $region21: #{tpu_custom_call.1} parent=11 // pred_check
          %p210 = pneg %p120
        $region22: #{tpu_custom_call.1} parent=11 // pred_check_branch
          %212 = sbr.rel (%p210) target = $region24
        $region23: #{tpu_custom_call.1} parent=11 // pred_region
          %s214 = ssub.s32 256, 256
          %215 = vsyncadd [#allocation12], %s214
          %s216 = sshll.u32 [#allocation11], 4
          %s217 = int_to_ptr.vmem [resolvable:$true] %s216
          %222 = dma.hbm_to_vmem [thread:$0]  %s3, 256, %s217, [#allocation12], 64, 64, 4
        $region24: #{tpu_custom_call.1} parent=11 // pred_fallthru
          _
        // Predicated region
        $region25: #{tpu_custom_call.1} parent=11 // pred_check
          %p223 = pneg %p141
        $region26: #{tpu_custom_call.1} parent=11 // pred_check_branch
          %225 = sbr.rel (%p223) target = $region28
        $region27: #{tpu_custom_call.1} parent=11 // pred_region
          _
        $region28: #{tpu_custom_call.1} parent=11 // pred_fallthru
          _
      $region12: #{tpu_custom_call.1} parent=5 // pred_fallthru
        _
      %p226 = scmp.lt.s32.totalorder %s19, 2
      // Predicated region
      $region29: #{tpu_custom_call.1} parent=5 // pred_check
        %p227 = pneg %p226
      $region30: #{tpu_custom_call.1} parent=5 // pred_check_branch
        %229 = sbr.rel (%p227) target = $region32
      $region31: #{tpu_custom_call.1} parent=5 // pred_region
        // Predicated region
        $region33: #{tpu_custom_call.1} parent=31 // pred_check
          %p230 = pneg %p51
        $region34: #{tpu_custom_call.1} parent=31 // pred_check_branch
          %232 = sbr.rel (%p230) target = $region36
        $region35: #{tpu_custom_call.1} parent=31 // pred_region
          %s233 = sand.u32 %s41, 1
          %s234 = scalar_lea.sflag [#allocation6], %s233
          %s235 = sand.u32 %s41, 1
          %s236 = smul.addr %s235, 8
          %s237 = scalar_lea.vmem [#allocation5], %s236
          %s239 = ssub.s32 128, 128
          %240 = vsyncadd %s234, %s239
          %s241 = smul.addr %s26, 128
          %s242 = scalar_lea.hbm %s0, %s241
          %s244 = sshll.u32 %s237, 4
          %s245 = int_to_ptr.vmem [resolvable:$true] %s244
          %247 = dma.hbm_to_vmem [thread:$0]  %s242, 128, %s245, %s234
        $region36: #{tpu_custom_call.1} parent=31 // pred_fallthru
          _
      $region32: #{tpu_custom_call.1} parent=5 // pred_fallthru
        _
      %p248 = scmp.le.s32.totalorder 1, %s19
      %p249 = scmp.lt.s32.totalorder %s19, 3
      %p250 = pnand %p248, %p249
      %p251 = pneg %p250
      // Predicated region
      $region37: #{tpu_custom_call.1} parent=5 // pred_check
        _
      $region38: #{tpu_custom_call.1} parent=5 // pred_check_branch
        %253 = sbr.rel (%p250) target = $region40
      $region39: #{tpu_custom_call.1} parent=5 // pred_region
        %s254 = ssub.s32 %s19, 1
        %s255 = sand.u32 %s44, 1
        %s256 = scalar_lea.sflag [#allocation6], %s255
        %s257 = sand.u32 %s44, 1
        %s258 = smul.addr %s257, 8
        %s259 = scalar_lea.vmem [#allocation5], %s258
        // Predicated region
        $region41: #{tpu_custom_call.1} parent=39 // pred_check
          %p260 = pneg %p57
        $region42: #{tpu_custom_call.1} parent=39 // pred_check_branch
          %262 = sbr.rel (%p260) target = $region44
        $region43: #{tpu_custom_call.1} parent=39 // pred_region
          %263 = dma.done %s256, 128
        $region44: #{tpu_custom_call.1} parent=39 // pred_fallthru
          _
        // Predicated region
        $region45: #{tpu_custom_call.1} parent=39 // pred_check
          %p264 = pneg %p78
        $region46: #{tpu_custom_call.1} parent=39 // pred_check_branch
          %266 = sbr.rel (%p264) target = $region48
        $region47: #{tpu_custom_call.1} parent=39 // pred_region
          %267 = dma.done [#allocation9], 256
        $region48: #{tpu_custom_call.1} parent=39 // pred_fallthru
          _
        // Predicated region
        $region49: #{tpu_custom_call.1} parent=39 // pred_check
          %p268 = pneg %p99
        $region50: #{tpu_custom_call.1} parent=39 // pred_check_branch
          %270 = sbr.rel (%p268) target = $region52
        $region51: #{tpu_custom_call.1} parent=39 // pred_region
          %271 = dma.done [#allocation9], 256
        $region52: #{tpu_custom_call.1} parent=39 // pred_fallthru
          _
        // Predicated region
        $region53: #{tpu_custom_call.1} parent=39 // pred_check
          %p272 = pneg %p120
        $region54: #{tpu_custom_call.1} parent=39 // pred_check_branch
          %274 = sbr.rel (%p272) target = $region56
        $region55: #{tpu_custom_call.1} parent=39 // pred_region
          %275 = dma.done [#allocation12], 256
        $region56: #{tpu_custom_call.1} parent=39 // pred_fallthru
          _
        %s276 = sand.u32 %s44, 1
        %s277 = scalar_lea.sflag [#allocation6], %s276
        %s278 = sand.u32 %s44, 1
        %s279 = smul.addr %s278, 8
        %s280 = scalar_lea.vmem [#allocation5], %s279
        %p281 = pneg %p57
        %p282 = pneg %p54
        %p283 = pneg %p78
        %p284 = pneg %p75
        %p285 = pneg %p99
        %p286 = pneg %p96
        %p287 = pneg %p120
        %p288 = pneg %p117
        %p289 = pneg %p141
        %p290 = pneg %p138
        %p291 = pneg %p169
        %p292 = pneg %p166
        %s293 = sand.u32 %s156, 1
        %s294 = scalar_lea.sflag [#allocation7], %s293
        %s295 = sand.u32 %s156, 1
        %s296 = smul.addr %s295, 8
        %s297 = scalar_lea.vmem [#allocation13], %s296
        %vm299 = vcmask 7168
        %300 = vst.msk [vmem:[#allocation2] sm:$0xff] %vm299, -1e+30
        %301 = vst.msk [vmem:[#allocation2 + $0x8] sm:$0xff] %vm299, -1e+30
        %302 = vst.msk [vmem:[#allocation2 + $0x10] sm:$0xff] %vm299, -1e+30
        %303 = vst.msk [vmem:[#allocation2 + $0x18] sm:$0xff] %vm299, -1e+30
        %304 = vst.msk [vmem:[#allocation3] sm:$0xff] %vm299, 0.0
        %305 = vst.msk [vmem:[#allocation3 + $0x8] sm:$0xff] %vm299, 0.0
        %306 = vst.msk [vmem:[#allocation3 + $0x10] sm:$0xff] %vm299, 0.0
        %307 = vst.msk [vmem:[#allocation3 + $0x18] sm:$0xff] %vm299, 0.0
        %vm308 = vcmask 261120
        %309 = vst.msk [vmem:[#allocation4] sm:$0xff] %vm308, 0.0
        %s310 = smul.u32 %s29, 8
        %s311 = scalar_lea.vmem %s259, %s310 [#allocation5]
        %v312 = vld [vmem:[%s311] sm:$0xff]
        %v313 = vpack.c.bf16 %v312, %v312
        %v314 = vld [vmem:[#allocation8] sm:$0xf]
        %v315 = vld [vmem:[#allocation8 + $0x4] sm:$0xf]
        %v316 = vld [vmem:[#allocation8 + $0x8] sm:$0xf]
        %v317 = vld [vmem:[#allocation8 + $0xc] sm:$0xf]
        %v322 = vunpack.c.l.b16 %v314
        %v323 = vunpack.c.l.b16 %v315
        %v324 = vunpack.c.l.b16 %v316
        %v325 = vunpack.c.l.b16 %v317
        %v326 = vpack.c.b16 %v323, %v322
        %v327 = vpack.c.b16 %v325, %v324
        %v331 = vsel %vm308, %v313, 0
        %333 = vmatprep.subr.bf16.mxu0 0
        %334 = vmatpush1.bf16.msra.mxu0 %v326
        %335 = vmatprep.subr.bf16.mxu0 0
        %336 = vmatpush1.bf16.msra.mxu0 %v327
        %337 = vmatprep.subr.bf16.mxu0 0
        %338 = vmatpush1.bf16.msra.mxu0 0
        %339 = vmatprep.subr.bf16.mxu0 0
        %340 = vmatpush1.bf16.msra.mxu0 0
        %341 = vmatprep.subr.bf16.mxu0 0
        %342 = vmatpush1.bf16.msra.mxu0 0
        %343 = vmatprep.subr.bf16.mxu0 0
        %344 = vmatpush1.bf16.msra.mxu0 0
        %345 = vmatprep.subr.bf16.mxu0 0
        %346 = vmatpush1.bf16.msra.mxu0 0
        %347 = vmatprep.subr.bf16.mxu0 0
        %348 = vmatpush1.bf16.msra.mxu0 0
        %349 = vmatprep.subr.bf16.mxu0 0
        %350 = vmatpush1.bf16.msra.mxu0 0
        %351 = vmatprep.subr.bf16.mxu0 0
        %352 = vmatpush1.bf16.msra.mxu0 0
        %353 = vmatprep.subr.bf16.mxu0 0
        %354 = vmatpush1.bf16.msra.mxu0 0
        %355 = vmatprep.subr.bf16.mxu0 0
        %356 = vmatpush1.bf16.msra.mxu0 0
        %357 = vmatprep.subr.bf16.mxu0 0
        %358 = vmatpush1.bf16.msra.mxu0 0
        %359 = vmatprep.subr.bf16.mxu0 0
        %360 = vmatpush1.bf16.msra.mxu0 0
        %361 = vmatprep.subr.bf16.mxu0 0
        %362 = vmatpush1.bf16.msra.mxu0 0
        %363 = vmatprep.subr.bf16.mxu0 0
        %364 = vmatpush1.bf16.msra.mxu0 0
        %365 = vmatprep.mubr.bf16.mxu0 0
        %366 = vmatmul.mubr.bf16.gmra.mrb[0].mxu0 %v331
        %v367 = vpop.f32.mrb[0].mxu0
        %v368 = vadd.f32 0.0, %v367
        %v369 = vpop.f32.mrb[0].mxu0
        %v370 = vpop.f32.mrb[0].mxu0
        %v371 = vpop.f32.mrb[0].mxu0
        %372 = vdwg.mxu0
        %v373 = vmul.f32 %v368, 0.35355338
        %v374 = vpack.c.bf16 %v373, %v373
        %v375 = vlaneseq
        %v376 = vshrl.u32 %v375, 7
        %v377 = vlaneseq
        %v378 = vand.u32 %v377, 127
        %vm379 = vcmp.le.s32.totalorder %v378, %v376
        // While loop
        $region57: #{tpu_custom_call.1} parent=39 // loop_pre_header
          _
        $region58: #{tpu_custom_call.1} parent=39 // loop_header
          %s381 = sphi 0, %s383
          %p382 = scmp.ge.s32.totalorder %s381, %s29
        $region59: #{tpu_custom_call.1} parent=39 // loop_header_branch
          %385 = sbr.rel (%p382) target = $region63
        $region60: #{tpu_custom_call.1} parent=39 // loop_body
          %s386 = smul.u32 %s381, 8
          %s387 = scalar_lea.vmem %s259, %s386 [#allocation5]
          %v388 = vld [vmem:[%s387] sm:$0xff]
          %v389 = vpack.c.bf16 %v388, %v388
          %v390 = vld [vmem:[#allocation10] sm:$0xf]
          %v391 = vld [vmem:[#allocation10 + $0x4] sm:$0xf]
          %v392 = vld [vmem:[#allocation10 + $0x8] sm:$0xf]
          %v393 = vld [vmem:[#allocation10 + $0xc] sm:$0xf]
          %v398 = vunpack.c.l.b16 %v390
          %v399 = vunpack.c.l.b16 %v391
          %v400 = vunpack.c.l.b16 %v392
          %v401 = vunpack.c.l.b16 %v393
          %v402 = vpack.c.b16 %v399, %v398
          %v403 = vpack.c.b16 %v401, %v400
          %v407 = vsel %vm308, %v389, 0
          %409 = vmatprep.subr.bf16.mxu0 0
          %410 = vmatpush1.bf16.msra.mxu0 %v402
          %411 = vmatprep.subr.bf16.mxu0 0
          %412 = vmatpush1.bf16.msra.mxu0 %v403
          %413 = vmatprep.subr.bf16.mxu0 0
          %414 = vmatpush1.bf16.msra.mxu0 0
          %415 = vmatprep.subr.bf16.mxu0 0
          %416 = vmatpush1.bf16.msra.mxu0 0
          %417 = vmatprep.subr.bf16.mxu0 0
          %418 = vmatpush1.bf16.msra.mxu0 0
          %419 = vmatprep.subr.bf16.mxu0 0
          %420 = vmatpush1.bf16.msra.mxu0 0
          %421 = vmatprep.subr.bf16.mxu0 0
          %422 = vmatpush1.bf16.msra.mxu0 0
          %423 = vmatprep.subr.bf16.mxu0 0
          %424 = vmatpush1.bf16.msra.mxu0 0
          %425 = vmatprep.subr.bf16.mxu0 0
          %426 = vmatpush1.bf16.msra.mxu0 0
          %427 = vmatprep.subr.bf16.mxu0 0
          %428 = vmatpush1.bf16.msra.mxu0 0
          %429 = vmatprep.subr.bf16.mxu0 0
          %430 = vmatpush1.bf16.msra.mxu0 0
          %431 = vmatprep.subr.bf16.mxu0 0
          %432 = vmatpush1.bf16.msra.mxu0 0
          %433 = vmatprep.subr.bf16.mxu0 0
          %434 = vmatpush1.bf16.msra.mxu0 0
          %435 = vmatprep.subr.bf16.mxu0 0
          %436 = vmatpush1.bf16.msra.mxu0 0
          %437 = vmatprep.subr.bf16.mxu0 0
          %438 = vmatpush1.bf16.msra.mxu0 0
          %439 = vmatprep.subr.bf16.mxu0 0
          %440 = vmatpush1.bf16.msra.mxu0 0
          %441 = vmatprep.mubr.bf16.mxu0 0
          %442 = vmatmul.mubr.bf16.gmra.mrb[0].mxu0 %v407
          %v443 = vpop.f32.mrb[0].mxu0
          %v444 = vadd.f32 0.0, %v443
          %v445 = vpop.f32.mrb[0].mxu0
          %v446 = vpop.f32.mrb[0].mxu0
          %v447 = vpop.f32.mrb[0].mxu0
          %448 = vdwg.mxu0
          %v449 = vpack.c.bf16 %v444, %v444
          %vm450 = vcmask 64512
          %v452 = vsel %vm450, %v374, 0
          %v455 = vsel %vm450, %v449, 0
          %457 = vmatprep.subr.bf16.mxu0 0
          %458 = vmatpush1.bf16.xpose.msra.mxu0 %v455
          %459 = vmatprep.subr.bf16.mxu0 0
          %460 = vmatpush1.bf16.xpose.msra.mxu0 0
          %461 = vmatprep.subr.bf16.mxu0 0
          %462 = vmatpush1.bf16.xpose.msra.mxu0 0
          %463 = vmatprep.subr.bf16.mxu0 0
          %464 = vmatpush1.bf16.xpose.msra.mxu0 0
          %465 = vmatprep.subr.bf16.mxu0 0
          %466 = vmatpush1.bf16.xpose.msra.mxu0 0
          %467 = vmatprep.subr.bf16.mxu0 0
          %468 = vmatpush1.bf16.xpose.msra.mxu0 0
          %469 = vmatprep.subr.bf16.mxu0 0
          %470 = vmatpush1.bf16.xpose.msra.mxu0 0
          %471 = vmatprep.subr.bf16.mxu0 0
          %472 = vmatpush1.bf16.xpose.msra.mxu0 0
          %473 = vmatprep.subr.bf16.mxu0 0
          %474 = vmatpush1.bf16.xpose.msra.mxu0 0
          %475 = vmatprep.subr.bf16.mxu0 0
          %476 = vmatpush1.bf16.xpose.msra.mxu0 0
          %477 = vmatprep.subr.bf16.mxu0 0
          %478 = vmatpush1.bf16.xpose.msra.mxu0 0
          %479 = vmatprep.subr.bf16.mxu0 0
          %480 = vmatpush1.bf16.xpose.msra.mxu0 0
          %481 = vmatprep.subr.bf16.mxu0 0
          %482 = vmatpush1.bf16.xpose.msra.mxu0 0
          %483 = vmatprep.subr.bf16.mxu0 0
          %484 = vmatpush1.bf16.xpose.msra.mxu0 0
          %485 = vmatprep.subr.bf16.mxu0 0
          %486 = vmatpush1.bf16.xpose.msra.mxu0 0
          %487 = vmatprep.subr.bf16.mxu0 0
          %488 = vmatpush1.bf16.xpose.msra.mxu0 0
          %489 = vmatprep.mubr.bf16.mxu0 0
          %490 = vmatmul.mubr.bf16.gmra.mrb[0].mxu0 %v452
          %v491 = vpop.f32.mrb[0].mxu0
          %v492 = vadd.f32 0.0, %v491
          %v493 = vpop.f32.mrb[0].mxu0
          %v494 = vpop.f32.mrb[0].mxu0
          %v495 = vpop.f32.mrb[0].mxu0
          %496 = vdwg.mxu0
          %v497 = vld [vmem:[#allocation2] sm:$0xff]
          %v498 = vsel %vm450, %v492, -inf
          %499 = vmax.xlane.f32.xlu0 %v498
          %v500 = vpop.xlane.xlu0 %499
          %v501 = vmax.f32 %v497, %v500
          %v502 = vsub.f32 %v497, %v501
          %v503 = vmul.f32 %v502, 1.442695
          %v504 = vpow.pop %v503
          %506 = vset.pattern.permute.xlu0 0
          %507 = vperm.xlu0 %506, %v501
          %v508 = vpop.permute.xlu0 %507
          %v510 = vsub.f32 %v492, %v508
          %v511 = vmul.f32 %v510, 1.442695
          %v512 = vpow.pop %v511
          %v513 = vld [vmem:[#allocation3] sm:$0xff]
          %v514 = vmul.f32 %v504, %v513
          %v515 = vsel %vm450, %v512, 0.0
          %516 = vadd.xlane.f32.xlu0 %v515
          %v517 = vpop.xlane.xlu0 %516
          %v518 = vadd.f32 %v514, %v517
          %519 = vst.msk [vmem:[#allocation3] sm:$0xff] %vm299, %v518
          %v520 = vld [vmem:[#allocation4] sm:$0xff]
          %522 = vset.pattern.permute.xlu0 0
          %523 = vperm.xlu0 %522, %v504
          %v524 = vpop.permute.xlu0 %523
          %v526 = vmul.f32 %v524, %v520
          %v527 = vpack.c.bf16 %v512, %v512
          %529 = vrot.lane.b32.xlu0 %v449, 96
          %v530 = vpop.permute.xlu0 %529
          %v532 = vsel %vm450, %v527, 0
          %vm534 = vcmask 1043456
          %v536 = vsel %vm534, %v530, 0
          %538 = vmatprep.subr.bf16.mxu0 0
          %539 = vmatpush1.bf16.msra.mxu0 %v536
          %540 = vmatprep.subr.bf16.mxu0 0
          %541 = vmatpush1.bf16.msra.mxu0 0
          %542 = vmatprep.subr.bf16.mxu0 0
          %543 = vmatpush1.bf16.msra.mxu0 0
          %544 = vmatprep.subr.bf16.mxu0 0
          %545 = vmatpush1.bf16.msra.mxu0 0
          %546 = vmatprep.subr.bf16.mxu0 0
          %547 = vmatpush1.bf16.msra.mxu0 0
          %548 = vmatprep.subr.bf16.mxu0 0
          %549 = vmatpush1.bf16.msra.mxu0 0
          %550 = vmatprep.subr.bf16.mxu0 0
          %551 = vmatpush1.bf16.msra.mxu0 0
          %552 = vmatprep.subr.bf16.mxu0 0
          %553 = vmatpush1.bf16.msra.mxu0 0
          %554 = vmatprep.subr.bf16.mxu0 0
          %555 = vmatpush1.bf16.msra.mxu0 0
          %556 = vmatprep.subr.bf16.mxu0 0
          %557 = vmatpush1.bf16.msra.mxu0 0
          %558 = vmatprep.subr.bf16.mxu0 0
          %559 = vmatpush1.bf16.msra.mxu0 0
          %560 = vmatprep.subr.bf16.mxu0 0
          %561 = vmatpush1.bf16.msra.mxu0 0
          %562 = vmatprep.subr.bf16.mxu0 0
          %563 = vmatpush1.bf16.msra.mxu0 0
          %564 = vmatprep.subr.bf16.mxu0 0
          %565 = vmatpush1.bf16.msra.mxu0 0
          %566 = vmatprep.subr.bf16.mxu0 0
          %567 = vmatpush1.bf16.msra.mxu0 0
          %568 = vmatprep.subr.bf16.mxu0 0
          %569 = vmatpush1.bf16.msra.mxu0 0
          %570 = vmatprep.mubr.bf16.mxu0 0
          %571 = vmatmul.mubr.bf16.gmra.mrb[0].mxu0 %v532
          %v572 = vpop.f32.mrb[0].mxu0
          %v573 = vadd.f32 0.0, %v572
          %v574 = vpop.f32.mrb[0].mxu0
          %v575 = vpop.f32.mrb[0].mxu0
          %v576 = vpop.f32.mrb[0].mxu0
          %577 = vdwg.mxu0
          %v578 = vadd.f32 %v526, %v573
          %579 = vst.msk [vmem:[#allocation4] sm:$0xff] %vm450, %v578
          %580 = vst.msk [vmem:[#allocation2] sm:$0xff] %vm299, %v501
          %582 = vrot.lane.b32.xlu0 %v374, 120
          %v583 = vpop.permute.xlu0 %582
          %584 = vrot.lane.b32.xlu0 %v449, 120
          %v585 = vpop.permute.xlu0 %584
          %v587 = vsel %vm450, %v583, 0
          %v590 = vsel %vm450, %v585, 0
          %592 = vmatprep.subr.bf16.mxu0 0
          %593 = vmatpush1.bf16.xpose.msra.mxu0 %v590
          %594 = vmatprep.subr.bf16.mxu0 0
          %595 = vmatpush1.bf16.xpose.msra.mxu0 0
          %596 = vmatprep.subr.bf16.mxu0 0
          %597 = vmatpush1.bf16.xpose.msra.mxu0 0
          %598 = vmatprep.subr.bf16.mxu0 0
          %599 = vmatpush1.bf16.xpose.msra.mxu0 0
          %600 = vmatprep.subr.bf16.mxu0 0
          %601 = vmatpush1.bf16.xpose.msra.mxu0 0
          %602 = vmatprep.subr.bf16.mxu0 0
          %603 = vmatpush1.bf16.xpose.msra.mxu0 0
          %604 = vmatprep.subr.bf16.mxu0 0
          %605 = vmatpush1.bf16.xpose.msra.mxu0 0
          %606 = vmatprep.subr.bf16.mxu0 0
          %607 = vmatpush1.bf16.xpose.msra.mxu0 0
          %608 = vmatprep.subr.bf16.mxu0 0
          %609 = vmatpush1.bf16.xpose.msra.mxu0 0
          %610 = vmatprep.subr.bf16.mxu0 0
          %611 = vmatpush1.bf16.xpose.msra.mxu0 0
          %612 = vmatprep.subr.bf16.mxu0 0
          %613 = vmatpush1.bf16.xpose.msra.mxu0 0
          %614 = vmatprep.subr.bf16.mxu0 0
          %615 = vmatpush1.bf16.xpose.msra.mxu0 0
          %616 = vmatprep.subr.bf16.mxu0 0
          %617 = vmatpush1.bf16.xpose.msra.mxu0 0
          %618 = vmatprep.subr.bf16.mxu0 0
          %619 = vmatpush1.bf16.xpose.msra.mxu0 0
          %620 = vmatprep.subr.bf16.mxu0 0
          %621 = vmatpush1.bf16.xpose.msra.mxu0 0
          %622 = vmatprep.subr.bf16.mxu0 0
          %623 = vmatpush1.bf16.xpose.msra.mxu0 0
          %624 = vmatprep.mubr.bf16.mxu0 0
          %625 = vmatmul.mubr.bf16.gmra.mrb[0].mxu0 %v587
          %v626 = vpop.f32.mrb[0].mxu0
          %v627 = vadd.f32 0.0, %v626
          %v628 = vpop.f32.mrb[0].mxu0
          %v629 = vpop.f32.mrb[0].mxu0
          %v630 = vpop.f32.mrb[0].mxu0
          %631 = vdwg.mxu0
          %s632 = scalar_lea.vmem [#allocation2], 8
          %v633 = vld [vmem:[%s632] sm:$0xff]
          %v634 = vsel %vm450, %v627, -inf
          %635 = vmax.xlane.f32.xlu0 %v634
          %v636 = vpop.xlane.xlu0 %635
          %v637 = vmax.f32 %v633, %v636
          %v638 = vsub.f32 %v633, %v637
          %v639 = vmul.f32 %v638, 1.442695
          %v640 = vpow.pop %v639
          %642 = vset.pattern.permute.xlu0 0
          %643 = vperm.xlu0 %642, %v637
          %v644 = vpop.permute.xlu0 %643
          %v646 = vsub.f32 %v627, %v644
          %v647 = vmul.f32 %v646, 1.442695
          %v648 = vpow.pop %v647
          %s649 = scalar_lea.vmem [#allocation3], 8
          %v650 = vld [vmem:[%s649] sm:$0xff]
          %v651 = vmul.f32 %v640, %v650
          %v652 = vsel %vm450, %v648, 0.0
          %653 = vadd.xlane.f32.xlu0 %v652
          %v654 = vpop.xlane.xlu0 %653
          %v655 = vadd.f32 %v651, %v654
          %656 = vst.msk [vmem:[%s649] sm:$0xff] %vm299, %v655
          %v657 = vld [vmem:[#allocation4] sm:$0xff]
          %659 = vset.pattern.permute.xlu0 0
          %660 = vperm.xlu0 %659, %v640
          %v661 = vpop.permute.xlu0 %660
          %v663 = vmul.f32 %v661, %v657
          %v664 = vpack.c.bf16 %v648, %v648
          %665 = vrot.lane.b32.xlu0 %v449, 88
          %v666 = vpop.permute.xlu0 %665
          %v668 = vsel %vm450, %v664, 0
          %v671 = vsel %vm534, %v666, 0
          %673 = vmatprep.subr.bf16.mxu0 0
          %674 = vmatpush1.bf16.msra.mxu0 %v671
          %675 = vmatprep.subr.bf16.mxu0 0
          %676 = vmatpush1.bf16.msra.mxu0 0
          %677 = vmatprep.subr.bf16.mxu0 0
          %678 = vmatpush1.bf16.msra.mxu0 0
          %679 = vmatprep.subr.bf16.mxu0 0
          %680 = vmatpush1.bf16.msra.mxu0 0
          %681 = vmatprep.subr.bf16.mxu0 0
          %682 = vmatpush1.bf16.msra.mxu0 0
          %683 = vmatprep.subr.bf16.mxu0 0
          %684 = vmatpush1.bf16.msra.mxu0 0
          %685 = vmatprep.subr.bf16.mxu0 0
          %686 = vmatpush1.bf16.msra.mxu0 0
          %687 = vmatprep.subr.bf16.mxu0 0
          %688 = vmatpush1.bf16.msra.mxu0 0
          %689 = vmatprep.subr.bf16.mxu0 0
          %690 = vmatpush1.bf16.msra.mxu0 0
          %691 = vmatprep.subr.bf16.mxu0 0
          %692 = vmatpush1.bf16.msra.mxu0 0
          %693 = vmatprep.subr.bf16.mxu0 0
          %694 = vmatpush1.bf16.msra.mxu0 0
          %695 = vmatprep.subr.bf16.mxu0 0
          %696 = vmatpush1.bf16.msra.mxu0 0
          %697 = vmatprep.subr.bf16.mxu0 0
          %698 = vmatpush1.bf16.msra.mxu0 0
          %699 = vmatprep.subr.bf16.mxu0 0
          %700 = vmatpush1.bf16.msra.mxu0 0
          %701 = vmatprep.subr.bf16.mxu0 0
          %702 = vmatpush1.bf16.msra.mxu0 0
          %703 = vmatprep.subr.bf16.mxu0 0
          %704 = vmatpush1.bf16.msra.mxu0 0
          %705 = vmatprep.mubr.bf16.mxu0 0
          %706 = vmatmul.mubr.bf16.gmra.mrb[0].mxu0 %v668
          %v707 = vpop.f32.mrb[0].mxu0
          %v708 = vadd.f32 0.0, %v707
          %v709 = vpop.f32.mrb[0].mxu0
          %v710 = vpop.f32.mrb[0].mxu0
          %v711 = vpop.f32.mrb[0].mxu0
          %712 = vdwg.mxu0
          %714 = vrot.lane.b32.xlu0 %v708, 8
          %v715 = vpop.permute.xlu0 %714
          %v717 = vadd.f32 %v663, %v715
          %vm718 = vcmask 130112
          %719 = vst.msk [vmem:[#allocation4] sm:$0xff] %vm718, %v717
          %720 = vst.msk [vmem:[%s632] sm:$0xff] %vm299, %v637
          %721 = vrot.lane.b32.xlu0 %v374, 112
          %v722 = vpop.permute.xlu0 %721
          %723 = vrot.lane.b32.xlu0 %v449, 112
          %v724 = vpop.permute.xlu0 %723
          %v726 = vsel %vm450, %v722, 0
          %v729 = vsel %vm450, %v724, 0
          %731 = vmatprep.subr.bf16.mxu0 0
          %732 = vmatpush1.bf16.xpose.msra.mxu0 %v729
          %733 = vmatprep.subr.bf16.mxu0 0
          %734 = vmatpush1.bf16.xpose.msra.mxu0 0
          %735 = vmatprep.subr.bf16.mxu0 0
          %736 = vmatpush1.bf16.xpose.msra.mxu0 0
          %737 = vmatprep.subr.bf16.mxu0 0
          %738 = vmatpush1.bf16.xpose.msra.mxu0 0
          %739 = vmatprep.subr.bf16.mxu0 0
          %740 = vmatpush1.bf16.xpose.msra.mxu0 0
          %741 = vmatprep.subr.bf16.mxu0 0
          %742 = vmatpush1.bf16.xpose.msra.mxu0 0
          %743 = vmatprep.subr.bf16.mxu0 0
          %744 = vmatpush1.bf16.xpose.msra.mxu0 0
          %745 = vmatprep.subr.bf16.mxu0 0
          %746 = vmatpush1.bf16.xpose.msra.mxu0 0
          %747 = vmatprep.subr.bf16.mxu0 0
          %748 = vmatpush1.bf16.xpose.msra.mxu0 0
          %749 = vmatprep.subr.bf16.mxu0 0
          %750 = vmatpush1.bf16.xpose.msra.mxu0 0
          %751 = vmatprep.subr.bf16.mxu0 0
          %752 = vmatpush1.bf16.xpose.msra.mxu0 0
          %753 = vmatprep.subr.bf16.mxu0 0
          %754 = vmatpush1.bf16.xpose.msra.mxu0 0
          %755 = vmatprep.subr.bf16.mxu0 0
          %756 = vmatpush1.bf16.xpose.msra.mxu0 0
          %757 = vmatprep.subr.bf16.mxu0 0
          %758 = vmatpush1.bf16.xpose.msra.mxu0 0
          %759 = vmatprep.subr.bf16.mxu0 0
          %760 = vmatpush1.bf16.xpose.msra.mxu0 0
          %761 = vmatprep.subr.bf16.mxu0 0
          %762 = vmatpush1.bf16.xpose.msra.mxu0 0
          %763 = vmatprep.mubr.bf16.mxu0 0
          %764 = vmatmul.mubr.bf16.gmra.mrb[0].mxu0 %v726
          %v765 = vpop.f32.mrb[0].mxu0
          %v766 = vadd.f32 0.0, %v765
          %v767 = vpop.f32.mrb[0].mxu0
          %v768 = vpop.f32.mrb[0].mxu0
          %v769 = vpop.f32.mrb[0].mxu0
          %770 = vdwg.mxu0
          %s771 = scalar_lea.vmem [#allocation2], 16
          %v772 = vld [vmem:[%s771] sm:$0xff]
          %v773 = vsel %vm450, %v766, -inf
          %774 = vmax.xlane.f32.xlu0 %v773
          %v775 = vpop.xlane.xlu0 %774
          %v776 = vmax.f32 %v772, %v775
          %v777 = vsub.f32 %v772, %v776
          %v778 = vmul.f32 %v777, 1.442695
          %v779 = vpow.pop %v778
          %781 = vset.pattern.permute.xlu0 0
          %782 = vperm.xlu0 %781, %v776
          %v783 = vpop.permute.xlu0 %782
          %v785 = vsub.f32 %v766, %v783
          %v786 = vmul.f32 %v785, 1.442695
          %v787 = vpow.pop %v786
          %s788 = scalar_lea.vmem [#allocation3], 16
          %v789 = vld [vmem:[%s788] sm:$0xff]
          %v790 = vmul.f32 %v779, %v789
          %v791 = vsel %vm450, %v787, 0.0
          %792 = vadd.xlane.f32.xlu0 %v791
          %v793 = vpop.xlane.xlu0 %792
          %v794 = vadd.f32 %v790, %v793
          %795 = vst.msk [vmem:[%s788] sm:$0xff] %vm299, %v794
          %v796 = vld [vmem:[#allocation4] sm:$0xff]
          %798 = vset.pattern.permute.xlu0 0
          %799 = vperm.xlu0 %798, %v779
          %v800 = vpop.permute.xlu0 %799
          %v802 = vmul.f32 %v800, %v796
          %v803 = vpack.c.bf16 %v787, %v787
          %804 = vrot.lane.b32.xlu0 %v449, 80
          %v805 = vpop.permute.xlu0 %804
          %v807 = vsel %vm450, %v803, 0
          %v810 = vsel %vm534, %v805, 0
          %812 = vmatprep.subr.bf16.mxu0 0
          %813 = vmatpush1.bf16.msra.mxu0 %v810
          %814 = vmatprep.subr.bf16.mxu0 0
          %815 = vmatpush1.bf16.msra.mxu0 0
          %816 = vmatprep.subr.bf16.mxu0 0
          %817 = vmatpush1.bf16.msra.mxu0 0
          %818 = vmatprep.subr.bf16.mxu0 0
          %819 = vmatpush1.bf16.msra.mxu0 0
          %820 = vmatprep.subr.bf16.mxu0 0
          %821 = vmatpush1.bf16.msra.mxu0 0
          %822 = vmatprep.subr.bf16.mxu0 0
          %823 = vmatpush1.bf16.msra.mxu0 0
          %824 = vmatprep.subr.bf16.mxu0 0
          %825 = vmatpush1.bf16.msra.mxu0 0
          %826 = vmatprep.subr.bf16.mxu0 0
          %827 = vmatpush1.bf16.msra.mxu0 0
          %828 = vmatprep.subr.bf16.mxu0 0
          %829 = vmatpush1.bf16.msra.mxu0 0
          %830 = vmatprep.subr.bf16.mxu0 0
          %831 = vmatpush1.bf16.msra.mxu0 0
          %832 = vmatprep.subr.bf16.mxu0 0
          %833 = vmatpush1.bf16.msra.mxu0 0
          %834 = vmatprep.subr.bf16.mxu0 0
          %835 = vmatpush1.bf16.msra.mxu0 0
          %836 = vmatprep.subr.bf16.mxu0 0
          %837 = vmatpush1.bf16.msra.mxu0 0
          %838 = vmatprep.subr.bf16.mxu0 0
          %839 = vmatpush1.bf16.msra.mxu0 0
          %840 = vmatprep.subr.bf16.mxu0 0
          %841 = vmatpush1.bf16.msra.mxu0 0
          %842 = vmatprep.subr.bf16.mxu0 0
          %843 = vmatpush1.bf16.msra.mxu0 0
          %844 = vmatprep.mubr.bf16.mxu0 0
          %845 = vmatmul.mubr.bf16.gmra.mrb[0].mxu0 %v807
          %v846 = vpop.f32.mrb[0].mxu0
          %v847 = vadd.f32 0.0, %v846
          %v848 = vpop.f32.mrb[0].mxu0
          %v849 = vpop.f32.mrb[0].mxu0
          %v850 = vpop.f32.mrb[0].mxu0
          %851 = vdwg.mxu0
          %853 = vrot.lane.b32.xlu0 %v847, 16
          %v854 = vpop.permute.xlu0 %853
          %v856 = vadd.f32 %v802, %v854
          %vm857 = vcmask 195712
          %858 = vst.msk [vmem:[#allocation4] sm:$0xff] %vm857, %v856
          %859 = vst.msk [vmem:[%s771] sm:$0xff] %vm299, %v776
          %860 = vrot.lane.b32.xlu0 %v374, 104
          %v861 = vpop.permute.xlu0 %860
          %862 = vrot.lane.b32.xlu0 %v449, 104
          %v863 = vpop.permute.xlu0 %862
          %v865 = vsel %vm450, %v861, 0
          %v868 = vsel %vm450, %v863, 0
          %870 = vmatprep.subr.bf16.mxu0 0
          %871 = vmatpush1.bf16.xpose.msra.mxu0 %v868
          %872 = vmatprep.subr.bf16.mxu0 0
          %873 = vmatpush1.bf16.xpose.msra.mxu0 0
          %874 = vmatprep.subr.bf16.mxu0 0
          %875 = vmatpush1.bf16.xpose.msra.mxu0 0
          %876 = vmatprep.subr.bf16.mxu0 0
          %877 = vmatpush1.bf16.xpose.msra.mxu0 0
          %878 = vmatprep.subr.bf16.mxu0 0
          %879 = vmatpush1.bf16.xpose.msra.mxu0 0
          %880 = vmatprep.subr.bf16.mxu0 0
          %881 = vmatpush1.bf16.xpose.msra.mxu0 0
          %882 = vmatprep.subr.bf16.mxu0 0
          %883 = vmatpush1.bf16.xpose.msra.mxu0 0
          %884 = vmatprep.subr.bf16.mxu0 0
          %885 = vmatpush1.bf16.xpose.msra.mxu0 0
          %886 = vmatprep.subr.bf16.mxu0 0
          %887 = vmatpush1.bf16.xpose.msra.mxu0 0
          %888 = vmatprep.subr.bf16.mxu0 0
          %889 = vmatpush1.bf16.xpose.msra.mxu0 0
          %890 = vmatprep.subr.bf16.mxu0 0
          %891 = vmatpush1.bf16.xpose.msra.mxu0 0
          %892 = vmatprep.subr.bf16.mxu0 0
          %893 = vmatpush1.bf16.xpose.msra.mxu0 0
          %894 = vmatprep.subr.bf16.mxu0 0
          %895 = vmatpush1.bf16.xpose.msra.mxu0 0
          %896 = vmatprep.subr.bf16.mxu0 0
          %897 = vmatpush1.bf16.xpose.msra.mxu0 0
          %898 = vmatprep.subr.bf16.mxu0 0
          %899 = vmatpush1.bf16.xpose.msra.mxu0 0
          %900 = vmatprep.subr.bf16.mxu0 0
          %901 = vmatpush1.bf16.xpose.msra.mxu0 0
          %902 = vmatprep.mubr.bf16.mxu0 0
          %903 = vmatmul.mubr.bf16.gmra.mrb[0].mxu0 %v865
          %v904 = vpop.f32.mrb[0].mxu0
          %v905 = vadd.f32 0.0, %v904
          %v906 = vpop.f32.mrb[0].mxu0
          %v907 = vpop.f32.mrb[0].mxu0
          %v908 = vpop.f32.mrb[0].mxu0
          %909 = vdwg.mxu0
          %s910 = scalar_lea.vmem [#allocation2], 24
          %v911 = vld [vmem:[%s910] sm:$0xff]
          %v912 = vsel %vm450, %v905, -inf
          %913 = vmax.xlane.f32.xlu0 %v912
          %v914 = vpop.xlane.xlu0 %913
          %v915 = vmax.f32 %v911, %v914
          %v916 = vsub.f32 %v911, %v915
          %v917 = vmul.f32 %v916, 1.442695
          %v918 = vpow.pop %v917
          %920 = vset.pattern.permute.xlu0 0
          %921 = vperm.xlu0 %920, %v915
          %v922 = vpop.permute.xlu0 %921
          %v924 = vsub.f32 %v905, %v922
          %v925 = vmul.f32 %v924, 1.442695
          %v926 = vpow.pop %v925
          %s927 = scalar_lea.vmem [#allocation3], 24
          %v928 = vld [vmem:[%s927] sm:$0xff]
          %v929 = vmul.f32 %v918, %v928
          %v930 = vsel %vm450, %v926, 0.0
          %931 = vadd.xlane.f32.xlu0 %v930
          %v932 = vpop.xlane.xlu0 %931
          %v933 = vadd.f32 %v929, %v932
          %934 = vst.msk [vmem:[%s927] sm:$0xff] %vm299, %v933
          %v935 = vld [vmem:[#allocation4] sm:$0xff]
          %937 = vset.pattern.permute.xlu0 0
          %938 = vperm.xlu0 %937, %v918
          %v939 = vpop.permute.xlu0 %938
          %v941 = vmul.f32 %v939, %v935
          %v942 = vpack.c.bf16 %v926, %v926
          %943 = vrot.lane.b32.xlu0 %v449, 72
          %v944 = vpop.permute.xlu0 %943
          %v946 = vsel %vm450, %v942, 0
          %v949 = vsel %vm534, %v944, 0
          %951 = vmatprep.subr.bf16.mxu0 0
          %952 = vmatpush1.bf16.msra.mxu0 %v949
          %953 = vmatprep.subr.bf16.mxu0 0
          %954 = vmatpush1.bf16.msra.mxu0 0
          %955 = vmatprep.subr.bf16.mxu0 0
          %956 = vmatpush1.bf16.msra.mxu0 0
          %957 = vmatprep.subr.bf16.mxu0 0
          %958 = vmatpush1.bf16.msra.mxu0 0
          %959 = vmatprep.subr.bf16.mxu0 0
          %960 = vmatpush1.bf16.msra.mxu0 0
          %961 = vmatprep.subr.bf16.mxu0 0
          %962 = vmatpush1.bf16.msra.mxu0 0
          %963 = vmatprep.subr.bf16.mxu0 0
          %964 = vmatpush1.bf16.msra.mxu0 0
          %965 = vmatprep.subr.bf16.mxu0 0
          %966 = vmatpush1.bf16.msra.mxu0 0
          %967 = vmatprep.subr.bf16.mxu0 0
          %968 = vmatpush1.bf16.msra.mxu0 0
          %969 = vmatprep.subr.bf16.mxu0 0
          %970 = vmatpush1.bf16.msra.mxu0 0
          %971 = vmatprep.subr.bf16.mxu0 0
          %972 = vmatpush1.bf16.msra.mxu0 0
          %973 = vmatprep.subr.bf16.mxu0 0
          %974 = vmatpush1.bf16.msra.mxu0 0
          %975 = vmatprep.subr.bf16.mxu0 0
          %976 = vmatpush1.bf16.msra.mxu0 0
          %977 = vmatprep.subr.bf16.mxu0 0
          %978 = vmatpush1.bf16.msra.mxu0 0
          %979 = vmatprep.subr.bf16.mxu0 0
          %980 = vmatpush1.bf16.msra.mxu0 0
          %981 = vmatprep.subr.bf16.mxu0 0
          %982 = vmatpush1.bf16.msra.mxu0 0
          %983 = vmatprep.mubr.bf16.mxu0 0
          %984 = vmatmul.mubr.bf16.gmra.mrb[0].mxu0 %v946
          %v985 = vpop.f32.mrb[0].mxu0
          %v986 = vadd.f32 0.0, %v985
          %v987 = vpop.f32.mrb[0].mxu0
          %v988 = vpop.f32.mrb[0].mxu0
          %v989 = vpop.f32.mrb[0].mxu0
          %990 = vdwg.mxu0
          %992 = vrot.lane.b32.xlu0 %v986, 24
          %v993 = vpop.permute.xlu0 %992
          %v995 = vadd.f32 %v941, %v993
          %vm996 = vcmask 261312
          %997 = vst.msk [vmem:[#allocation4] sm:$0xff] %vm996, %v995
          %998 = vst.msk [vmem:[%s910] sm:$0xff] %vm299, %v915
        $region61: #{tpu_custom_call.1} parent=39 // loop_footer
          %s383 = sadd.s32 %s381, 1
        $region62: #{tpu_custom_call.1} parent=39 // loop_footer_branch
          %380 = sbr.rel target = $region58
        $region63: #{tpu_custom_call.1} parent=39 // loop_exit
          _
        %v999 = vld [vmem:[%s311] sm:$0xff]
        %v1000 = vpack.c.bf16 %v999, %v999
        %v1001 = vld [vmem:[#allocation10] sm:$0xf]
        %v1002 = vld [vmem:[#allocation10 + $0x4] sm:$0xf]
        %v1003 = vld [vmem:[#allocation10 + $0x8] sm:$0xf]
        %v1004 = vld [vmem:[#allocation10 + $0xc] sm:$0xf]
        %v1009 = vunpack.c.l.b16 %v1001
        %v1010 = vunpack.c.l.b16 %v1002
        %v1011 = vunpack.c.l.b16 %v1003
        %v1012 = vunpack.c.l.b16 %v1004
        %v1013 = vpack.c.b16 %v1010, %v1009
        %v1014 = vpack.c.b16 %v1012, %v1011
        %v1018 = vsel %vm308, %v1000, 0
        %1020 = vmatprep.subr.bf16.mxu0 0
        %1021 = vmatpush1.bf16.msra.mxu0 %v1013
        %1022 = vmatprep.subr.bf16.mxu0 0
        %1023 = vmatpush1.bf16.msra.mxu0 %v1014
        %1024 = vmatprep.subr.bf16.mxu0 0
        %1025 = vmatpush1.bf16.msra.mxu0 0
        %1026 = vmatprep.subr.bf16.mxu0 0
        %1027 = vmatpush1.bf16.msra.mxu0 0
        %1028 = vmatprep.subr.bf16.mxu0 0
        %1029 = vmatpush1.bf16.msra.mxu0 0
        %1030 = vmatprep.subr.bf16.mxu0 0
        %1031 = vmatpush1.bf16.msra.mxu0 0
        %1032 = vmatprep.subr.bf16.mxu0 0
        %1033 = vmatpush1.bf16.msra.mxu0 0
        %1034 = vmatprep.subr.bf16.mxu0 0
        %1035 = vmatpush1.bf16.msra.mxu0 0
        %1036 = vmatprep.subr.bf16.mxu0 0
        %1037 = vmatpush1.bf16.msra.mxu0 0
        %1038 = vmatprep.subr.bf16.mxu0 0
        %1039 = vmatpush1.bf16.msra.mxu0 0
        %1040 = vmatprep.subr.bf16.mxu0 0
        %1041 = vmatpush1.bf16.msra.mxu0 0
        %1042 = vmatprep.subr.bf16.mxu0 0
        %1043 = vmatpush1.bf16.msra.mxu0 0
        %1044 = vmatprep.subr.bf16.mxu0 0
        %1045 = vmatpush1.bf16.msra.mxu0 0
        %1046 = vmatprep.subr.bf16.mxu0 0
        %1047 = vmatpush1.bf16.msra.mxu0 0
        %1048 = vmatprep.subr.bf16.mxu0 0
        %1049 = vmatpush1.bf16.msra.mxu0 0
        %1050 = vmatprep.subr.bf16.mxu0 0
        %1051 = vmatpush1.bf16.msra.mxu0 0
        %1052 = vmatprep.mubr.bf16.mxu0 0
        %1053 = vmatmul.mubr.bf16.gmra.mrb[0].mxu0 %v1018
        %v1054 = vpop.f32.mrb[0].mxu0
        %v1055 = vadd.f32 0.0, %v1054
        %v1056 = vpop.f32.mrb[0].mxu0
        %v1057 = vpop.f32.mrb[0].mxu0
        %v1058 = vpop.f32.mrb[0].mxu0
        %1059 = vdwg.mxu0
        %v1060 = vpack.c.bf16 %v1055, %v1055
        %vm1061 = vcmask 64512
        %v1063 = vsel %vm1061, %v374, 0
        %v1066 = vsel %vm1061, %v1060, 0
        %1068 = vmatprep.subr.bf16.mxu0 0
        %1069 = vmatpush1.bf16.xpose.msra.mxu0 %v1066
        %1070 = vmatprep.subr.bf16.mxu0 0
        %1071 = vmatpush1.bf16.xpose.msra.mxu0 0
        %1072 = vmatprep.subr.bf16.mxu0 0
        %1073 = vmatpush1.bf16.xpose.msra.mxu0 0
        %1074 = vmatprep.subr.bf16.mxu0 0
        %1075 = vmatpush1.bf16.xpose.msra.mxu0 0
        %1076 = vmatprep.subr.bf16.mxu0 0
        %1077 = vmatpush1.bf16.xpose.msra.mxu0 0
        %1078 = vmatprep.subr.bf16.mxu0 0
        %1079 = vmatpush1.bf16.xpose.msra.mxu0 0
        %1080 = vmatprep.subr.bf16.mxu0 0
        %1081 = vmatpush1.bf16.xpose.msra.mxu0 0
        %1082 = vmatprep.subr.bf16.mxu0 0
        %1083 = vmatpush1.bf16.xpose.msra.mxu0 0
        %1084 = vmatprep.subr.bf16.mxu0 0
        %1085 = vmatpush1.bf16.xpose.msra.mxu0 0
        %1086 = vmatprep.subr.bf16.mxu0 0
        %1087 = vmatpush1.bf16.xpose.msra.mxu0 0
        %1088 = vmatprep.subr.bf16.mxu0 0
        %1089 = vmatpush1.bf16.xpose.msra.mxu0 0
        %1090 = vmatprep.subr.bf16.mxu0 0
        %1091 = vmatpush1.bf16.xpose.msra.mxu0 0
        %1092 = vmatprep.subr.bf16.mxu0 0
        %1093 = vmatpush1.bf16.xpose.msra.mxu0 0
        %1094 = vmatprep.subr.bf16.mxu0 0
        %1095 = vmatpush1.bf16.xpose.msra.mxu0 0
        %1096 = vmatprep.subr.bf16.mxu0 0
        %1097 = vmatpush1.bf16.xpose.msra.mxu0 0
        %1098 = vmatprep.subr.bf16.mxu0 0
        %1099 = vmatpush1.bf16.xpose.msra.mxu0 0
        %1100 = vmatprep.mubr.bf16.mxu0 0
        %1101 = vmatmul.mubr.bf16.gmra.mrb[0].mxu0 %v1063
        %v1102 = vpop.f32.mrb[0].mxu0
        %v1103 = vadd.f32 0.0, %v1102
        %v1104 = vpop.f32.mrb[0].mxu0
        %v1105 = vpop.f32.mrb[0].mxu0
        %v1106 = vpop.f32.mrb[0].mxu0
        %1107 = vdwg.mxu0
        %v1108 = vsel %vm379, %v1103, -1e+30
        %v1109 = vld [vmem:[#allocation2] sm:$0xff]
        %v1110 = vsel %vm1061, %v1108, -inf
        %1111 = vmax.xlane.f32.xlu0 %v1110
        %v1112 = vpop.xlane.xlu0 %1111
        %v1113 = vmax.f32 %v1109, %v1112
        %v1114 = vsub.f32 %v1109, %v1113
        %v1115 = vmul.f32 %v1114, 1.442695
        %v1116 = vpow.pop %v1115
        %1118 = vset.pattern.permute.xlu0 0
        %1119 = vperm.xlu0 %1118, %v1113
        %v1120 = vpop.permute.xlu0 %1119
        %v1122 = vsub.f32 %v1108, %v1120
        %v1123 = vmul.f32 %v1122, 1.442695
        %v1124 = vpow.pop %v1123
        %v1125 = vld [vmem:[#allocation3] sm:$0xff]
        %v1126 = vmul.f32 %v1116, %v1125
        %v1127 = vsel %vm1061, %v1124, 0.0
        %1128 = vadd.xlane.f32.xlu0 %v1127
        %v1129 = vpop.xlane.xlu0 %1128
        %v1130 = vadd.f32 %v1126, %v1129
        %1131 = vst.msk [vmem:[#allocation3] sm:$0xff] %vm299, %v1130
        %v1132 = vld [vmem:[#allocation4] sm:$0xff]
        %1134 = vset.pattern.permute.xlu0 0
        %1135 = vperm.xlu0 %1134, %v1116
        %v1136 = vpop.permute.xlu0 %1135
        %v1138 = vmul.f32 %v1136, %v1132
        %v1139 = vpack.c.bf16 %v1124, %v1124
        %1141 = vrot.lane.b32.xlu0 %v1060, 96
        %v1142 = vpop.permute.xlu0 %1141
        %v1144 = vsel %vm1061, %v1139, 0
        %vm1146 = vcmask 1043456
        %v1148 = vsel %vm1146, %v1142, 0
        %1150 = vmatprep.subr.bf16.mxu0 0
        %1151 = vmatpush1.bf16.msra.mxu0 %v1148
        %1152 = vmatprep.subr.bf16.mxu0 0
        %1153 = vmatpush1.bf16.msra.mxu0 0
        %1154 = vmatprep.subr.bf16.mxu0 0
        %1155 = vmatpush1.bf16.msra.mxu0 0
        %1156 = vmatprep.subr.bf16.mxu0 0
        %1157 = vmatpush1.bf16.msra.mxu0 0
        %1158 = vmatprep.subr.bf16.mxu0 0
        %1159 = vmatpush1.bf16.msra.mxu0 0
        %1160 = vmatprep.subr.bf16.mxu0 0
        %1161 = vmatpush1.bf16.msra.mxu0 0
        %1162 = vmatprep.subr.bf16.mxu0 0
        %1163 = vmatpush1.bf16.msra.mxu0 0
        %1164 = vmatprep.subr.bf16.mxu0 0
        %1165 = vmatpush1.bf16.msra.mxu0 0
        %1166 = vmatprep.subr.bf16.mxu0 0
        %1167 = vmatpush1.bf16.msra.mxu0 0
        %1168 = vmatprep.subr.bf16.mxu0 0
        %1169 = vmatpush1.bf16.msra.mxu0 0
        %1170 = vmatprep.subr.bf16.mxu0 0
        %1171 = vmatpush1.bf16.msra.mxu0 0
        %1172 = vmatprep.subr.bf16.mxu0 0
        %1173 = vmatpush1.bf16.msra.mxu0 0
        %1174 = vmatprep.subr.bf16.mxu0 0
        %1175 = vmatpush1.bf16.msra.mxu0 0
        %1176 = vmatprep.subr.bf16.mxu0 0
        %1177 = vmatpush1.bf16.msra.mxu0 0
        %1178 = vmatprep.subr.bf16.mxu0 0
        %1179 = vmatpush1.bf16.msra.mxu0 0
        %1180 = vmatprep.subr.bf16.mxu0 0
        %1181 = vmatpush1.bf16.msra.mxu0 0
        %1182 = vmatprep.mubr.bf16.mxu0 0
        %1183 = vmatmul.mubr.bf16.gmra.mrb[0].mxu0 %v1144
        %v1184 = vpop.f32.mrb[0].mxu0
        %v1185 = vadd.f32 0.0, %v1184
        %v1186 = vpop.f32.mrb[0].mxu0
        %v1187 = vpop.f32.mrb[0].mxu0
        %v1188 = vpop.f32.mrb[0].mxu0
        %1189 = vdwg.mxu0
        %v1190 = vadd.f32 %v1138, %v1185
        %1191 = vst.msk [vmem:[#allocation4] sm:$0xff] %vm1061, %v1190
        %1192 = vst.msk [vmem:[#allocation2] sm:$0xff] %vm299, %v1113
        %1194 = vrot.lane.b32.xlu0 %v374, 120
        %v1195 = vpop.permute.xlu0 %1194
        %1196 = vrot.lane.b32.xlu0 %v1060, 120
        %v1197 = vpop.permute.xlu0 %1196
        %v1199 = vsel %vm1061, %v1195, 0
        %v1202 = vsel %vm1061, %v1197, 0
        %1204 = vmatprep.subr.bf16.mxu0 0
        %1205 = vmatpush1.bf16.xpose.msra.mxu0 %v1202
        %1206 = vmatprep.subr.bf16.mxu0 0
        %1207 = vmatpush1.bf16.xpose.msra.mxu0 0
        %1208 = vmatprep.subr.bf16.mxu0 0
        %1209 = vmatpush1.bf16.xpose.msra.mxu0 0
        %1210 = vmatprep.subr.bf16.mxu0 0
        %1211 = vmatpush1.bf16.xpose.msra.mxu0 0
        %1212 = vmatprep.subr.bf16.mxu0 0
        %1213 = vmatpush1.bf16.xpose.msra.mxu0 0
        %1214 = vmatprep.subr.bf16.mxu0 0
        %1215 = vmatpush1.bf16.xpose.msra.mxu0 0
        %1216 = vmatprep.subr.bf16.mxu0 0
        %1217 = vmatpush1.bf16.xpose.msra.mxu0 0
        %1218 = vmatprep.subr.bf16.mxu0 0
        %1219 = vmatpush1.bf16.xpose.msra.mxu0 0
        %1220 = vmatprep.subr.bf16.mxu0 0
        %1221 = vmatpush1.bf16.xpose.msra.mxu0 0
        %1222 = vmatprep.subr.bf16.mxu0 0
        %1223 = vmatpush1.bf16.xpose.msra.mxu0 0
        %1224 = vmatprep.subr.bf16.mxu0 0
        %1225 = vmatpush1.bf16.xpose.msra.mxu0 0
        %1226 = vmatprep.subr.bf16.mxu0 0
        %1227 = vmatpush1.bf16.xpose.msra.mxu0 0
        %1228 = vmatprep.subr.bf16.mxu0 0
        %1229 = vmatpush1.bf16.xpose.msra.mxu0 0
        %1230 = vmatprep.subr.bf16.mxu0 0
        %1231 = vmatpush1.bf16.xpose.msra.mxu0 0
        %1232 = vmatprep.subr.bf16.mxu0 0
        %1233 = vmatpush1.bf16.xpose.msra.mxu0 0
        %1234 = vmatprep.subr.bf16.mxu0 0
        %1235 = vmatpush1.bf16.xpose.msra.mxu0 0
        %1236 = vmatprep.mubr.bf16.mxu0 0
        %1237 = vmatmul.mubr.bf16.gmra.mrb[0].mxu0 %v1199
        %v1238 = vpop.f32.mrb[0].mxu0
        %v1239 = vadd.f32 0.0, %v1238
        %v1240 = vpop.f32.mrb[0].mxu0
        %v1241 = vpop.f32.mrb[0].mxu0
        %v1242 = vpop.f32.mrb[0].mxu0
        %1243 = vdwg.mxu0
        %v1244 = vsel %vm379, %v1239, -1e+30
        %s1245 = scalar_lea.vmem [#allocation2], 8
        %v1246 = vld [vmem:[%s1245] sm:$0xff]
        %v1247 = vsel %vm1061, %v1244, -inf
        %1248 = vmax.xlane.f32.xlu0 %v1247
        %v1249 = vpop.xlane.xlu0 %1248
        %v1250 = vmax.f32 %v1246, %v1249
        %v1251 = vsub.f32 %v1246, %v1250
        %v1252 = vmul.f32 %v1251, 1.442695
        %v1253 = vpow.pop %v1252
        %1255 = vset.pattern.permute.xlu0 0
        %1256 = vperm.xlu0 %1255, %v1250
        %v1257 = vpop.permute.xlu0 %1256
        %v1259 = vsub.f32 %v1244, %v1257
        %v1260 = vmul.f32 %v1259, 1.442695
        %v1261 = vpow.pop %v1260
        %s1262 = scalar_lea.vmem [#allocation3], 8
        %v1263 = vld [vmem:[%s1262] sm:$0xff]
        %v1264 = vmul.f32 %v1253, %v1263
        %v1265 = vsel %vm1061, %v1261, 0.0
        %1266 = vadd.xlane.f32.xlu0 %v1265
        %v1267 = vpop.xlane.xlu0 %1266
        %v1268 = vadd.f32 %v1264, %v1267
        %1269 = vst.msk [vmem:[%s1262] sm:$0xff] %vm299, %v1268
        %v1270 = vld [vmem:[#allocation4] sm:$0xff]
        %1272 = vset.pattern.permute.xlu0 0
        %1273 = vperm.xlu0 %1272, %v1253
        %v1274 = vpop.permute.xlu0 %1273
        %v1276 = vmul.f32 %v1274, %v1270
        %v1277 = vpack.c.bf16 %v1261, %v1261
        %1278 = vrot.lane.b32.xlu0 %v1060, 88
        %v1279 = vpop.permute.xlu0 %1278
        %v1281 = vsel %vm1061, %v1277, 0
        %v1284 = vsel %vm1146, %v1279, 0
        %1286 = vmatprep.subr.bf16.mxu0 0
        %1287 = vmatpush1.bf16.msra.mxu0 %v1284
        %1288 = vmatprep.subr.bf16.mxu0 0
        %1289 = vmatpush1.bf16.msra.mxu0 0
        %1290 = vmatprep.subr.bf16.mxu0 0
        %1291 = vmatpush1.bf16.msra.mxu0 0
        %1292 = vmatprep.subr.bf16.mxu0 0
        %1293 = vmatpush1.bf16.msra.mxu0 0
        %1294 = vmatprep.subr.bf16.mxu0 0
        %1295 = vmatpush1.bf16.msra.mxu0 0
        %1296 = vmatprep.subr.bf16.mxu0 0
        %1297 = vmatpush1.bf16.msra.mxu0 0
        %1298 = vmatprep.subr.bf16.mxu0 0
        %1299 = vmatpush1.bf16.msra.mxu0 0
        %1300 = vmatprep.subr.bf16.mxu0 0
        %1301 = vmatpush1.bf16.msra.mxu0 0
        %1302 = vmatprep.subr.bf16.mxu0 0
        %1303 = vmatpush1.bf16.msra.mxu0 0
        %1304 = vmatprep.subr.bf16.mxu0 0
        %1305 = vmatpush1.bf16.msra.mxu0 0
        %1306 = vmatprep.subr.bf16.mxu0 0
        %1307 = vmatpush1.bf16.msra.mxu0 0
        %1308 = vmatprep.subr.bf16.mxu0 0
        %1309 = vmatpush1.bf16.msra.mxu0 0
        %1310 = vmatprep.subr.bf16.mxu0 0
        %1311 = vmatpush1.bf16.msra.mxu0 0
        %1312 = vmatprep.subr.bf16.mxu0 0
        %1313 = vmatpush1.bf16.msra.mxu0 0
        %1314 = vmatprep.subr.bf16.mxu0 0
        %1315 = vmatpush1.bf16.msra.mxu0 0
        %1316 = vmatprep.subr.bf16.mxu0 0
        %1317 = vmatpush1.bf16.msra.mxu0 0
        %1318 = vmatprep.mubr.bf16.mxu0 0
        %1319 = vmatmul.mubr.bf16.gmra.mrb[0].mxu0 %v1281
        %v1320 = vpop.f32.mrb[0].mxu0
        %v1321 = vadd.f32 0.0, %v1320
        %v1322 = vpop.f32.mrb[0].mxu0
        %v1323 = vpop.f32.mrb[0].mxu0
        %v1324 = vpop.f32.mrb[0].mxu0
        %1325 = vdwg.mxu0
        %1327 = vrot.lane.b32.xlu0 %v1321, 8
        %v1328 = vpop.permute.xlu0 %1327
        %v1330 = vadd.f32 %v1276, %v1328
        %vm1331 = vcmask 130112
        %1332 = vst.msk [vmem:[#allocation4] sm:$0xff] %vm1331, %v1330
        %1333 = vst.msk [vmem:[%s1245] sm:$0xff] %vm299, %v1250
        %1334 = vrot.lane.b32.xlu0 %v374, 112
        %v1335 = vpop.permute.xlu0 %1334
        %1336 = vrot.lane.b32.xlu0 %v1060, 112
        %v1337 = vpop.permute.xlu0 %1336
        %v1339 = vsel %vm1061, %v1335, 0
        %v1342 = vsel %vm1061, %v1337, 0
        %1344 = vmatprep.subr.bf16.mxu0 0
        %1345 = vmatpush1.bf16.xpose.msra.mxu0 %v1342
        %1346 = vmatprep.subr.bf16.mxu0 0
        %1347 = vmatpush1.bf16.xpose.msra.mxu0 0
        %1348 = vmatprep.subr.bf16.mxu0 0
        %1349 = vmatpush1.bf16.xpose.msra.mxu0 0
        %1350 = vmatprep.subr.bf16.mxu0 0
        %1351 = vmatpush1.bf16.xpose.msra.mxu0 0
        %1352 = vmatprep.subr.bf16.mxu0 0
        %1353 = vmatpush1.bf16.xpose.msra.mxu0 0
        %1354 = vmatprep.subr.bf16.mxu0 0
        %1355 = vmatpush1.bf16.xpose.msra.mxu0 0
        %1356 = vmatprep.subr.bf16.mxu0 0
        %1357 = vmatpush1.bf16.xpose.msra.mxu0 0
        %1358 = vmatprep.subr.bf16.mxu0 0
        %1359 = vmatpush1.bf16.xpose.msra.mxu0 0
        %1360 = vmatprep.subr.bf16.mxu0 0
        %1361 = vmatpush1.bf16.xpose.msra.mxu0 0
        %1362 = vmatprep.subr.bf16.mxu0 0
        %1363 = vmatpush1.bf16.xpose.msra.mxu0 0
        %1364 = vmatprep.subr.bf16.mxu0 0
        %1365 = vmatpush1.bf16.xpose.msra.mxu0 0
        %1366 = vmatprep.subr.bf16.mxu0 0
        %1367 = vmatpush1.bf16.xpose.msra.mxu0 0
        %1368 = vmatprep.subr.bf16.mxu0 0
        %1369 = vmatpush1.bf16.xpose.msra.mxu0 0
        %1370 = vmatprep.subr.bf16.mxu0 0
        %1371 = vmatpush1.bf16.xpose.msra.mxu0 0
        %1372 = vmatprep.subr.bf16.mxu0 0
        %1373 = vmatpush1.bf16.xpose.msra.mxu0 0
        %1374 = vmatprep.subr.bf16.mxu0 0
        %1375 = vmatpush1.bf16.xpose.msra.mxu0 0
        %1376 = vmatprep.mubr.bf16.mxu0 0
        %1377 = vmatmul.mubr.bf16.gmra.mrb[0].mxu0 %v1339
        %v1378 = vpop.f32.mrb[0].mxu0
        %v1379 = vadd.f32 0.0, %v1378
        %v1380 = vpop.f32.mrb[0].mxu0
        %v1381 = vpop.f32.mrb[0].mxu0
        %v1382 = vpop.f32.mrb[0].mxu0
        %1383 = vdwg.mxu0
        %v1384 = vsel %vm379, %v1379, -1e+30
        %s1385 = scalar_lea.vmem [#allocation2], 16
        %v1386 = vld [vmem:[%s1385] sm:$0xff]
        %v1387 = vsel %vm1061, %v1384, -inf
        %1388 = vmax.xlane.f32.xlu0 %v1387
        %v1389 = vpop.xlane.xlu0 %1388
        %v1390 = vmax.f32 %v1386, %v1389
        %v1391 = vsub.f32 %v1386, %v1390
        %v1392 = vmul.f32 %v1391, 1.442695
        %v1393 = vpow.pop %v1392
        %1395 = vset.pattern.permute.xlu0 0
        %1396 = vperm.xlu0 %1395, %v1390
        %v1397 = vpop.permute.xlu0 %1396
        %v1399 = vsub.f32 %v1384, %v1397
        %v1400 = vmul.f32 %v1399, 1.442695
        %v1401 = vpow.pop %v1400
        %s1402 = scalar_lea.vmem [#allocation3], 16
        %v1403 = vld [vmem:[%s1402] sm:$0xff]
        %v1404 = vmul.f32 %v1393, %v1403
        %v1405 = vsel %vm1061, %v1401, 0.0
        %1406 = vadd.xlane.f32.xlu0 %v1405
        %v1407 = vpop.xlane.xlu0 %1406
        %v1408 = vadd.f32 %v1404, %v1407
        %1409 = vst.msk [vmem:[%s1402] sm:$0xff] %vm299, %v1408
        %v1410 = vld [vmem:[#allocation4] sm:$0xff]
        %1412 = vset.pattern.permute.xlu0 0
        %1413 = vperm.xlu0 %1412, %v1393
        %v1414 = vpop.permute.xlu0 %1413
        %v1416 = vmul.f32 %v1414, %v1410
        %v1417 = vpack.c.bf16 %v1401, %v1401
        %1418 = vrot.lane.b32.xlu0 %v1060, 80
        %v1419 = vpop.permute.xlu0 %1418
        %v1421 = vsel %vm1061, %v1417, 0
        %v1424 = vsel %vm1146, %v1419, 0
        %1426 = vmatprep.subr.bf16.mxu0 0
        %1427 = vmatpush1.bf16.msra.mxu0 %v1424
        %1428 = vmatprep.subr.bf16.mxu0 0
        %1429 = vmatpush1.bf16.msra.mxu0 0
        %1430 = vmatprep.subr.bf16.mxu0 0
        %1431 = vmatpush1.bf16.msra.mxu0 0
        %1432 = vmatprep.subr.bf16.mxu0 0
        %1433 = vmatpush1.bf16.msra.mxu0 0
        %1434 = vmatprep.subr.bf16.mxu0 0
        %1435 = vmatpush1.bf16.msra.mxu0 0
        %1436 = vmatprep.subr.bf16.mxu0 0
        %1437 = vmatpush1.bf16.msra.mxu0 0
        %1438 = vmatprep.subr.bf16.mxu0 0
        %1439 = vmatpush1.bf16.msra.mxu0 0
        %1440 = vmatprep.subr.bf16.mxu0 0
        %1441 = vmatpush1.bf16.msra.mxu0 0
        %1442 = vmatprep.subr.bf16.mxu0 0
        %1443 = vmatpush1.bf16.msra.mxu0 0
        %1444 = vmatprep.subr.bf16.mxu0 0
        %1445 = vmatpush1.bf16.msra.mxu0 0
        %1446 = vmatprep.subr.bf16.mxu0 0
        %1447 = vmatpush1.bf16.msra.mxu0 0
        %1448 = vmatprep.subr.bf16.mxu0 0
        %1449 = vmatpush1.bf16.msra.mxu0 0
        %1450 = vmatprep.subr.bf16.mxu0 0
        %1451 = vmatpush1.bf16.msra.mxu0 0
        %1452 = vmatprep.subr.bf16.mxu0 0
        %1453 = vmatpush1.bf16.msra.mxu0 0
        %1454 = vmatprep.subr.bf16.mxu0 0
        %1455 = vmatpush1.bf16.msra.mxu0 0
        %1456 = vmatprep.subr.bf16.mxu0 0
        %1457 = vmatpush1.bf16.msra.mxu0 0
        %1458 = vmatprep.mubr.bf16.mxu0 0
        %1459 = vmatmul.mubr.bf16.gmra.mrb[0].mxu0 %v1421
        %v1460 = vpop.f32.mrb[0].mxu0
        %v1461 = vadd.f32 0.0, %v1460
        %v1462 = vpop.f32.mrb[0].mxu0
        %v1463 = vpop.f32.mrb[0].mxu0
        %v1464 = vpop.f32.mrb[0].mxu0
        %1465 = vdwg.mxu0
        %1467 = vrot.lane.b32.xlu0 %v1461, 16
        %v1468 = vpop.permute.xlu0 %1467
        %v1470 = vadd.f32 %v1416, %v1468
        %vm1471 = vcmask 195712
        %1472 = vst.msk [vmem:[#allocation4] sm:$0xff] %vm1471, %v1470
        %1473 = vst.msk [vmem:[%s1385] sm:$0xff] %vm299, %v1390
        %1474 = vrot.lane.b32.xlu0 %v374, 104
        %v1475 = vpop.permute.xlu0 %1474
        %1476 = vrot.lane.b32.xlu0 %v1060, 104
        %v1477 = vpop.permute.xlu0 %1476
        %v1479 = vsel %vm1061, %v1475, 0
        %v1482 = vsel %vm1061, %v1477, 0
        %1484 = vmatprep.subr.bf16.mxu0 0
        %1485 = vmatpush1.bf16.xpose.msra.mxu0 %v1482
        %1486 = vmatprep.subr.bf16.mxu0 0
        %1487 = vmatpush1.bf16.xpose.msra.mxu0 0
        %1488 = vmatprep.subr.bf16.mxu0 0
        %1489 = vmatpush1.bf16.xpose.msra.mxu0 0
        %1490 = vmatprep.subr.bf16.mxu0 0
        %1491 = vmatpush1.bf16.xpose.msra.mxu0 0
        %1492 = vmatprep.subr.bf16.mxu0 0
        %1493 = vmatpush1.bf16.xpose.msra.mxu0 0
        %1494 = vmatprep.subr.bf16.mxu0 0
        %1495 = vmatpush1.bf16.xpose.msra.mxu0 0
        %1496 = vmatprep.subr.bf16.mxu0 0
        %1497 = vmatpush1.bf16.xpose.msra.mxu0 0
        %1498 = vmatprep.subr.bf16.mxu0 0
        %1499 = vmatpush1.bf16.xpose.msra.mxu0 0
        %1500 = vmatprep.subr.bf16.mxu0 0
        %1501 = vmatpush1.bf16.xpose.msra.mxu0 0
        %1502 = vmatprep.subr.bf16.mxu0 0
        %1503 = vmatpush1.bf16.xpose.msra.mxu0 0
        %1504 = vmatprep.subr.bf16.mxu0 0
        %1505 = vmatpush1.bf16.xpose.msra.mxu0 0
        %1506 = vmatprep.subr.bf16.mxu0 0
        %1507 = vmatpush1.bf16.xpose.msra.mxu0 0
        %1508 = vmatprep.subr.bf16.mxu0 0
        %1509 = vmatpush1.bf16.xpose.msra.mxu0 0
        %1510 = vmatprep.subr.bf16.mxu0 0
        %1511 = vmatpush1.bf16.xpose.msra.mxu0 0
        %1512 = vmatprep.subr.bf16.mxu0 0
        %1513 = vmatpush1.bf16.xpose.msra.mxu0 0
        %1514 = vmatprep.subr.bf16.mxu0 0
        %1515 = vmatpush1.bf16.xpose.msra.mxu0 0
        %1516 = vmatprep.mubr.bf16.mxu0 0
        %1517 = vmatmul.mubr.bf16.gmra.mrb[0].mxu0 %v1479
        %v1518 = vpop.f32.mrb[0].mxu0
        %v1519 = vadd.f32 0.0, %v1518
        %v1520 = vpop.f32.mrb[0].mxu0
        %v1521 = vpop.f32.mrb[0].mxu0
        %v1522 = vpop.f32.mrb[0].mxu0
        %1523 = vdwg.mxu0
        %v1524 = vsel %vm379, %v1519, -1e+30
        %s1525 = scalar_lea.vmem [#allocation2], 24
        %v1526 = vld [vmem:[%s1525] sm:$0xff]
        %v1527 = vsel %vm1061, %v1524, -inf
        %1528 = vmax.xlane.f32.xlu0 %v1527
        %v1529 = vpop.xlane.xlu0 %1528
        %v1530 = vmax.f32 %v1526, %v1529
        %v1531 = vsub.f32 %v1526, %v1530
        %v1532 = vmul.f32 %v1531, 1.442695
        %v1533 = vpow.pop %v1532
        %1535 = vset.pattern.permute.xlu0 0
        %1536 = vperm.xlu0 %1535, %v1530
        %v1537 = vpop.permute.xlu0 %1536
        %v1539 = vsub.f32 %v1524, %v1537
        %v1540 = vmul.f32 %v1539, 1.442695
        %v1541 = vpow.pop %v1540
        %s1542 = scalar_lea.vmem [#allocation3], 24
        %v1543 = vld [vmem:[%s1542] sm:$0xff]
        %v1544 = vmul.f32 %v1533, %v1543
        %v1545 = vsel %vm1061, %v1541, 0.0
        %1546 = vadd.xlane.f32.xlu0 %v1545
        %v1547 = vpop.xlane.xlu0 %1546
        %v1548 = vadd.f32 %v1544, %v1547
        %1549 = vst.msk [vmem:[%s1542] sm:$0xff] %vm299, %v1548
        %v1550 = vld [vmem:[#allocation4] sm:$0xff]
        %1552 = vset.pattern.permute.xlu0 0
        %1553 = vperm.xlu0 %1552, %v1533
        %v1554 = vpop.permute.xlu0 %1553
        %v1556 = vmul.f32 %v1554, %v1550
        %v1557 = vpack.c.bf16 %v1541, %v1541
        %1558 = vrot.lane.b32.xlu0 %v1060, 72
        %v1559 = vpop.permute.xlu0 %1558
        %v1561 = vsel %vm1061, %v1557, 0
        %v1564 = vsel %vm1146, %v1559, 0
        %1566 = vmatprep.subr.bf16.mxu0 0
        %1567 = vmatpush1.bf16.msra.mxu0 %v1564
        %1568 = vmatprep.subr.bf16.mxu0 0
        %1569 = vmatpush1.bf16.msra.mxu0 0
        %1570 = vmatprep.subr.bf16.mxu0 0
        %1571 = vmatpush1.bf16.msra.mxu0 0
        %1572 = vmatprep.subr.bf16.mxu0 0
        %1573 = vmatpush1.bf16.msra.mxu0 0
        %1574 = vmatprep.subr.bf16.mxu0 0
        %1575 = vmatpush1.bf16.msra.mxu0 0
        %1576 = vmatprep.subr.bf16.mxu0 0
        %1577 = vmatpush1.bf16.msra.mxu0 0
        %1578 = vmatprep.subr.bf16.mxu0 0
        %1579 = vmatpush1.bf16.msra.mxu0 0
        %1580 = vmatprep.subr.bf16.mxu0 0
        %1581 = vmatpush1.bf16.msra.mxu0 0
        %1582 = vmatprep.subr.bf16.mxu0 0
        %1583 = vmatpush1.bf16.msra.mxu0 0
        %1584 = vmatprep.subr.bf16.mxu0 0
        %1585 = vmatpush1.bf16.msra.mxu0 0
        %1586 = vmatprep.subr.bf16.mxu0 0
        %1587 = vmatpush1.bf16.msra.mxu0 0
        %1588 = vmatprep.subr.bf16.mxu0 0
        %1589 = vmatpush1.bf16.msra.mxu0 0
        %1590 = vmatprep.subr.bf16.mxu0 0
        %1591 = vmatpush1.bf16.msra.mxu0 0
        %1592 = vmatprep.subr.bf16.mxu0 0
        %1593 = vmatpush1.bf16.msra.mxu0 0
        %1594 = vmatprep.subr.bf16.mxu0 0
        %1595 = vmatpush1.bf16.msra.mxu0 0
        %1596 = vmatprep.subr.bf16.mxu0 0
        %1597 = vmatpush1.bf16.msra.mxu0 0
        %1598 = vmatprep.mubr.bf16.mxu0 0
        %1599 = vmatmul.mubr.bf16.gmra.mrb[0].mxu0 %v1561
        %v1600 = vpop.f32.mrb[0].mxu0
        %v1601 = vadd.f32 0.0, %v1600
        %v1602 = vpop.f32.mrb[0].mxu0
        %v1603 = vpop.f32.mrb[0].mxu0
        %v1604 = vpop.f32.mrb[0].mxu0
        %1605 = vdwg.mxu0
        %1607 = vrot.lane.b32.xlu0 %v1601, 24
        %v1608 = vpop.permute.xlu0 %1607
        %v1610 = vadd.f32 %v1556, %v1608
        %vm1611 = vcmask 261312
        %1612 = vst.msk [vmem:[#allocation4] sm:$0xff] %vm1611, %v1610
        %1613 = vst.msk [vmem:[%s1525] sm:$0xff] %vm299, %v1530
        %v1614 = vld [vmem:[#allocation3] sm:$0xff]
        %v1615 = vrcp.pop %v1614
        %v1616 = vld [vmem:[#allocation4] sm:$0xff]
        %1618 = vset.pattern.permute.xlu0 0
        %1619 = vperm.xlu0 %1618, %v1615
        %v1620 = vpop.permute.xlu0 %1619
        %v1622 = vmul.f32 %v1616, %v1620
        %1623 = vst.msk [vmem:[#allocation4] sm:$0xff] %vm1061, %v1622
        %v1624 = vld [vmem:[%s1262] sm:$0xff]
        %v1625 = vrcp.pop %v1624
        %v1626 = vld [vmem:[#allocation4] sm:$0xff]
        %1628 = vset.pattern.permute.xlu0 0
        %1629 = vperm.xlu0 %1628, %v1625
        %v1630 = vpop.permute.xlu0 %1629
        %v1632 = vmul.f32 %v1626, %v1630
        %1633 = vst.msk [vmem:[#allocation4] sm:$0xff] %vm1331, %v1632
        %v1634 = vld [vmem:[%s1402] sm:$0xff]
        %v1635 = vrcp.pop %v1634
        %v1636 = vld [vmem:[#allocation4] sm:$0xff]
        %1638 = vset.pattern.permute.xlu0 0
        %1639 = vperm.xlu0 %1638, %v1635
        %v1640 = vpop.permute.xlu0 %1639
        %v1642 = vmul.f32 %v1636, %v1640
        %1643 = vst.msk [vmem:[#allocation4] sm:$0xff] %vm1471, %v1642
        %v1644 = vld [vmem:[%s1542] sm:$0xff]
        %v1645 = vrcp.pop %v1644
        %v1646 = vld [vmem:[#allocation4] sm:$0xff]
        %1648 = vset.pattern.permute.xlu0 0
        %1649 = vperm.xlu0 %1648, %v1645
        %v1650 = vpop.permute.xlu0 %1649
        %v1652 = vmul.f32 %v1646, %v1650
        %1653 = vst.msk [vmem:[#allocation4] sm:$0xff] %vm1611, %v1652
        %v1654 = vld [vmem:[#allocation4] sm:$0xff]
        %v1655 = vpack.c.bf16 %v1654, %v1654
        %v1656 = vld [vmem:[#allocation11] sm:$0xf]
        %v1657 = vld [vmem:[#allocation11 + $0x4] sm:$0xf]
        %v1658 = vld [vmem:[#allocation11 + $0x8] sm:$0xf]
        %v1659 = vld [vmem:[#allocation11 + $0xc] sm:$0xf]
        %v1660 = vld [vmem:[%s4] sm:$0x1]
        %v1662 = vlaneseq
        %v1663 = vshrl.u32 %v1662, 7
        %v1664 = vsub.s32 0, %v1663
        %v1665 = vrot.slane %v1660, %v1664
        %v1671 = vunpack.c.l.b16 %v1656
        %v1672 = vunpack.c.l.b16 %v1657
        %v1673 = vunpack.c.l.b16 %v1658
        %v1674 = vunpack.c.l.b16 %v1659
        %v1675 = vpack.c.b16 %v1672, %v1671
        %v1676 = vpack.c.b16 %v1674, %v1673
        %v1680 = vsel %vm308, %v1655, 0
        %1682 = vmatprep.subr.bf16.mxu0 0
        %1683 = vmatpush1.bf16.msra.mxu0 %v1675
        %1684 = vmatprep.subr.bf16.mxu0 0
        %1685 = vmatpush1.bf16.msra.mxu0 %v1676
        %1686 = vmatprep.subr.bf16.mxu0 0
        %1687 = vmatpush1.bf16.msra.mxu0 0
        %1688 = vmatprep.subr.bf16.mxu0 0
        %1689 = vmatpush1.bf16.msra.mxu0 0
        %1690 = vmatprep.subr.bf16.mxu0 0
        %1691 = vmatpush1.bf16.msra.mxu0 0
        %1692 = vmatprep.subr.bf16.mxu0 0
        %1693 = vmatpush1.bf16.msra.mxu0 0
        %1694 = vmatprep.subr.bf16.mxu0 0
        %1695 = vmatpush1.bf16.msra.mxu0 0
        %1696 = vmatprep.subr.bf16.mxu0 0
        %1697 = vmatpush1.bf16.msra.mxu0 0
        %1698 = vmatprep.subr.bf16.mxu0 0
        %1699 = vmatpush1.bf16.msra.mxu0 0
        %1700 = vmatprep.subr.bf16.mxu0 0
        %1701 = vmatpush1.bf16.msra.mxu0 0
        %1702 = vmatprep.subr.bf16.mxu0 0
        %1703 = vmatpush1.bf16.msra.mxu0 0
        %1704 = vmatprep.subr.bf16.mxu0 0
        %1705 = vmatpush1.bf16.msra.mxu0 0
        %1706 = vmatprep.subr.bf16.mxu0 0
        %1707 = vmatpush1.bf16.msra.mxu0 0
        %1708 = vmatprep.subr.bf16.mxu0 0
        %1709 = vmatpush1.bf16.msra.mxu0 0
        %1710 = vmatprep.subr.bf16.mxu0 0
        %1711 = vmatpush1.bf16.msra.mxu0 0
        %1712 = vmatprep.subr.bf16.mxu0 0
        %1713 = vmatpush1.bf16.msra.mxu0 0
        %1714 = vmatprep.mubr.bf16.mxu0 0
        %1715 = vmatmul.mubr.bf16.gmra.mrb[0].mxu0 %v1680
        %v1716 = vpop.f32.mrb[0].mxu0
        %v1717 = vadd.f32 %v1665, %v1716
        %v1718 = vpop.f32.mrb[0].mxu0
        %v1719 = vpop.f32.mrb[0].mxu0
        %v1720 = vpop.f32.mrb[0].mxu0
        %1721 = vdwg.mxu0
        %1722 = vst.msk [vmem:[%s297] sm:$0xff] %vm308, %v1717
        %s1723 = sand.u32 %s156, 1
        %s1724 = scalar_lea.sflag [#allocation7], %s1723
        %s1725 = sand.u32 %s156, 1
        %s1726 = smul.addr %s1725, 8
        %s1727 = scalar_lea.vmem [#allocation13], %s1726
        // Predicated region
        $region64: #{tpu_custom_call.1} parent=39 // pred_check
          %p1728 = pneg %p166
        $region65: #{tpu_custom_call.1} parent=39 // pred_check_branch
          %1730 = sbr.rel (%p1728) target = $region67
        $region66: #{tpu_custom_call.1} parent=39 // pred_region
          %s1732 = ssub.s32 128, 128
          %1733 = vsyncadd %s1724, %s1732
          %s1734 = sadd.s32 %s29, %s28
          %s1735 = smul.addr %s1734, 128
          %s1736 = scalar_lea.hbm %s5, %s1735
          %s1738 = sshll.u32 %s1727, 4
          %s1739 = int_to_ptr.vmem [resolvable:$true] %s1738
          %1741 = dma.vmem_to_hbm [thread:$0]  %s1739, 128, %s1736, %s1724
        $region67: #{tpu_custom_call.1} parent=39 // pred_fallthru
          _
      $region40: #{tpu_custom_call.1} parent=5 // pred_fallthru
        _
      %p1742 = scmp.le.s32.totalorder 2, %s19
      // Predicated region
      $region68: #{tpu_custom_call.1} parent=5 // pred_check
        %p1743 = pneg %p1742
      $region69: #{tpu_custom_call.1} parent=5 // pred_check_branch
        %1745 = sbr.rel (%p1743) target = $region71
      $region70: #{tpu_custom_call.1} parent=5 // pred_region
        %s1746 = ssub.s32 %s19, 2
        // Predicated region
        $region72: #{tpu_custom_call.1} parent=70 // pred_check
          %p1747 = pneg %p172
        $region73: #{tpu_custom_call.1} parent=70 // pred_check_branch
          %1749 = sbr.rel (%p1747) target = $region75
        $region74: #{tpu_custom_call.1} parent=70 // pred_region
          %s1750 = sand.u32 %s157, 1
          %s1751 = scalar_lea.sflag [#allocation7], %s1750
          %s1752 = sand.u32 %s157, 1
          %s1753 = smul.addr %s1752, 8
          %s1754 = scalar_lea.vmem [#allocation13], %s1753
          %1755 = dma.done %s1751, 128
        $region75: #{tpu_custom_call.1} parent=70 // pred_fallthru
          _
      $region71: #{tpu_custom_call.1} parent=5 // pred_fallthru
        _
    $region6: #{tpu_custom_call.1} parent=1 // loop_footer
      %s23 = sadd.s32 1, %s19
    $region7: #{tpu_custom_call.1} parent=1 // loop_footer_branch
      %18 = sbr.rel target = $region3
    $region8: #{tpu_custom_call.1} parent=1 // loop_exit
      _
    %1756 = vsyncpa [#allocation6], 1
    %s1757 = scalar_lea.sflag [#allocation6], 1
    %1758 = vsyncpa %s1757, 1
    %1759 = vsyncpa [#allocation9], 1
    %1760 = vsyncpa [#allocation12], 1
    %1761 = vsyncpa [#allocation7], 1
    %s1762 = scalar_lea.sflag [#allocation7], 1
    %1763 = vsyncpa %s1762, 1

</llo_original>
